<compile_context>
chip_gen: v7x
topology: tpu7x:2x2x1
jax: 0.10.0
libtpu: 0.0.40
codegen_flags: <defaults>
</compile_context>

<pallas_src>
import jax
import jax.numpy as jnp
from jax.experimental import pallas as pl
from jax.experimental.pallas import tpu as pltpu  # noqa: F401  (imported for completeness)

FEAT = 32        # feat_dim (module hard-codes 32 channels; concat gives 64)
CONV_HID = 64    # hidden channels of both predictors
KSIZE = 3        # Conv1d kernel size (padding=1 -> 'same')


def _erf_approx(x):
    """Abramowitz & Stegun 7.1.26 erf (max abs err ~1.5e-7); Mosaic-safe ops only."""
    a1, a2, a3 = 0.254829592, -0.284496736, 1.421413741
    a4, a5, pc = -1.453152027, 1.061405429, 0.3275911
    ax = jnp.abs(x)
    t = 1.0 / (1.0 + pc * ax)
    poly = ((((a5 * t + a4) * t + a3) * t + a2) * t + a1) * t
    y = 1.0 - poly * jnp.exp(-(ax * ax))
    return jnp.where(x >= 0.0, y, -y)


def _gelu_erf(x):
    # erf-exact GELU (PyTorch nn.GELU() default), via the polynomial erf above.
    return 0.5 * x * (1.0 + _erf_approx(x * jnp.float32(0.7071067811865476)))


def diffusion_kernel(v_ref, a_ref, nv_ref, na_ref, temb_ref, ac_ref,
                     wg_ref, bg_ref, w1_ref, b1_ref, w2_ref, b2_ref,
                     pv_ref, pa_ref):
    """Single program: whole batch, both branches, two outputs."""
    B, L, C = v_ref.shape                        # (B, L, 32)

    v = v_ref[...]
    a = a_ref[...]

    # local_gate: sigmoid(Linear(latent_dim -> 32)) on the timestep embedding.
    z = jnp.dot(temb_ref[...], wg_ref[...],
                preferred_element_type=jnp.float32) + bg_ref[...]        # (B, 32)
    gate = 1.0 / (1.0 + jnp.exp(-z))

    # q_sample with per-channel gated noise (sqrt() done in-kernel).
    ac = ac_ref[...][:, :, None]                                         # (B, 1, 1)
    sa = jnp.sqrt(ac)
    s1m = jnp.sqrt(1.0 - ac)
    g = gate[:, None, :]                                                 # (B, 1, 32)
    noisy_v = sa * v + s1m * (nv_ref[...] * g)                           # (B, L, 32)
    noisy_a = sa * a + s1m * (na_ref[...] * g)

    def flat(x):                                  # (B, L, C) -> (B*L, C)
        return x.reshape(B * L, x.shape[-1])

    def shift_down(y):                            # out[l] = y[l-1], zero at l=0
        return jnp.concatenate([jnp.zeros_like(y[:, :1]), y[:, :L - 1]], axis=1)

    def shift_up(y):                              # out[l] = y[l+1], zero at l=L-1
        return jnp.concatenate([y[:, 1:], jnp.zeros_like(y[:, :1])], axis=1)

    # Both branches' first convs fused: sources x block-structured (32, 128)
    # slabs (cols 0:64 = v2a, cols 64:128 = a2v); no lane concat anywhere.
    sources = (flat(noisy_v), flat(a), flat(noisy_a), flat(v))

    def conv1_tap(k):
        y = jnp.dot(sources[0], w1_ref[k, 0], preferred_element_type=jnp.float32)
        for s in range(1, 4):
            y = y + jnp.dot(sources[s], w1_ref[k, s],
                            preferred_element_type=jnp.float32)
        return y.reshape(B, L, 2 * CONV_HID)

    h = shift_down(conv1_tap(0)) + conv1_tap(1) + shift_up(conv1_tap(2)) \
        + b1_ref[...]                                                    # (B, L, 128)
    h = _gelu_erf(h)

    # Second convs fused via a (128, 64) block-diagonal slab per tap.
    hf = h.reshape(B * L, 2 * CONV_HID)

    def conv2_tap(k):
        return jnp.dot(hf, w2_ref[k],
                       preferred_element_type=jnp.float32).reshape(B, L, 2 * FEAT)

    y = shift_down(conv2_tap(0)) + conv2_tap(1) + shift_up(conv2_tap(2)) \
        + b2_ref[...]                                                    # (B, L, 64)

    pv_ref[...] = y[:, :, :FEAT].astype(pv_ref.dtype)
    pa_ref[...] = y[:, :, FEAT:].astype(pa_ref.dtype)


@jax.jit
def local_aware_diffusion_pallas(v_caps, a_caps, t_emb, ac_t, noise_v, noise_a, kp):
    B, L, C = v_caps.shape
    assert C == FEAT
    out_shape = (jax.ShapeDtypeStruct((B, L, FEAT), jnp.float32),
                 jax.ShapeDtypeStruct((B, L, FEAT), jnp.float32))
    # Grid-less call: every operand rides whole into VMEM (total ~0.4 MiB),
    # no BlockSpec pipelining needed at this footprint (fine on v7x's 64 MiB too).
    pred_v, pred_a = pl.pallas_call(
        diffusion_kernel,
        out_shape=out_shape,
    )(v_caps, a_caps, noise_v, noise_a, t_emb, ac_t,
      kp["wg_t"], kp["bg"], kp["w1"], kp["b1"], kp["w2"], kp["b2"])
    return pred_v, pred_a


# ----------------------------- parameters & reference -----------------------------

def init_params(key, latent_dim=512, timesteps=500):
    """Torch-layout parameters (Linear (out,in); Conv1d (Cout,Cin,K)) + diffusion buffers."""
    ks = jax.random.split(key, 11)
    s = 0.1
    p = {
        "temb":   s * jax.random.normal(ks[0], (timesteps, latent_dim), jnp.float32),
        "wg":     s * jax.random.normal(ks[1], (FEAT, latent_dim), jnp.float32),
        "bg":     s * jax.random.normal(ks[2], (FEAT,), jnp.float32),
        "w1_v2a": s * jax.random.normal(ks[3], (CONV_HID, 2 * FEAT, KSIZE), jnp.float32),
        "b1_v2a": s * jax.random.normal(ks[4], (CONV_HID,), jnp.float32),
        "w2_v2a": s * jax.random.normal(ks[5], (FEAT, CONV_HID, KSIZE), jnp.float32),
        "b2_v2a": s * jax.random.normal(ks[6], (FEAT,), jnp.float32),
        "w1_a2v": s * jax.random.normal(ks[7], (CONV_HID, 2 * FEAT, KSIZE), jnp.float32),
        "b1_a2v": s * jax.random.normal(ks[8], (CONV_HID,), jnp.float32),
        "w2_a2v": s * jax.random.normal(ks[9], (FEAT, CONV_HID, KSIZE), jnp.float32),
        "b2_a2v": s * jax.random.normal(ks[10], (FEAT,), jnp.float32),
    }
    betas = jnp.linspace(1e-4, 0.02, timesteps, dtype=jnp.float32)
    p["alpha_cumprod"] = jnp.cumprod(1.0 - betas)
    return p


def prepare_kernel_params(p):
    """Repack torch-layout weights into block-structured kernel slabs (done once)."""
    def taps(w):   # (Cout, Cin, K) -> (K, Cin, Cout): [k, ci, co] = w[co, ci, k]
        return jnp.transpose(w, (2, 1, 0))

    # conv1: (K, source, 32, 128).  source 0/1 feed the v2a half (cols 0:64),
    # source 2/3 feed the a2v half (cols 64:128).
    w1 = jnp.zeros((KSIZE, 4, FEAT, 2 * CONV_HID), jnp.float32)
    w1 = w1.at[:, 0, :, :CONV_HID].set(taps(p["w1_v2a"][:, :FEAT, :]))   # noisy_v
    w1 = w1.at[:, 1, :, :CONV_HID].set(taps(p["w1_v2a"][:, FEAT:, :]))   # a (other)
    w1 = w1.at[:, 2, :, CONV_HID:].set(taps(p["w1_a2v"][:, :FEAT, :]))   # noisy_a
    w1 = w1.at[:, 3, :, CONV_HID:].set(taps(p["w1_a2v"][:, FEAT:, :]))   # v (other)

    # conv2: (K, 128, 64) block-diagonal over the two branches.
    w2 = jnp.zeros((KSIZE, 2 * CONV_HID, 2 * FEAT), jnp.float32)
    w2 = w2.at[:, :CONV_HID, :FEAT].set(taps(p["w2_v2a"]))
    w2 = w2.at[:, CONV_HID:, FEAT:].set(taps(p["w2_a2v"]))

    return {
        "wg_t": jnp.transpose(p["wg"]),                                       # (latent, 32)
        "bg":   p["bg"].reshape(1, FEAT),
        "w1":   w1,                                                           # (3, 4, 32, 128)
        "b1":   jnp.concatenate([p["b1_v2a"], p["b1_a2v"]]).reshape(1, 2 * CONV_HID),
        "w2":   w2,                                                           # (3, 128, 64)
        "b2":   jnp.concatenate([p["b2_v2a"], p["b2_a2v"]]).reshape(1, 2 * FEAT),
    }


def sample_forward_randomness(key, params, B, L):
    """Stochastic part of forward(): timestep draw, embedding lookup, noise draw."""
    # TODO(synk): torch.randint / torch.randn / nn.Embedding gather have no in-kernel
    # equivalent here; they are sampled with jax.random in the wrapper and fed as tensors.
    T = params["alpha_cumprod"].shape[0]
    kt, kv, ka = jax.random.split(key, 3)
    t = jax.random.randint(kt, (B,), 0, T)
    t_emb = params["temb"][t]                                   # (B, latent)
    ac_t = params["alpha_cumprod"][t].reshape(B, 1)             # (B, 1)
    noise_v = jax.random.normal(kv, (B, L, FEAT), jnp.float32)  # channels-last noise
    noise_a = jax.random.normal(ka, (B, L, FEAT), jnp.float32)
    return t_emb, ac_t, noise_v, noise_a


def reference_forward(v_caps, a_caps, t_emb, ac_t, noise_v_cl, noise_a_cl, p):
    """Pure-JAX reference mirroring the PyTorch module (channels-first convs, erf GELU)."""
    hi = jax.lax.Precision.HIGHEST
    B = v_caps.shape[0]
    gate = jax.nn.sigmoid(jnp.dot(t_emb, p["wg"].T, precision=hi) + p["bg"])   # (B, 32)
    v_t = jnp.swapaxes(v_caps, 1, 2)                      # (B, 32, L)
    a_t = jnp.swapaxes(a_caps, 1, 2)
    g = gate[:, :, None]
    noise_v = jnp.swapaxes(noise_v_cl, 1, 2) * g
    noise_a = jnp.swapaxes(noise_a_cl, 1, 2) * g
    sa = jnp.sqrt(ac_t).reshape(B, 1, 1)
    s1m = jnp.sqrt(1.0 - ac_t).reshape(B, 1, 1)
    noisy_v = sa * v_t + s1m * noise_v
    noisy_a = sa * a_t + s1m * noise_a
    v2a = jnp.concatenate([noisy_v, a_t], axis=1)         # (B, 64, L)
    a2v = jnp.concatenate([noisy_a, v_t], axis=1)

    def conv1d(x, w, b):
        y = jax.lax.conv_general_dilated(
            x, w, window_strides=(1,), padding=((1, 1),),
            dimension_numbers=("NCH", "OIH", "NCH"), precision=hi)
        return y + b[None, :, None]

    gelu = lambda x: jax.nn.gelu(x, approximate=False)     # erf-exact, as in PyTorch
    pred_v = conv1d(gelu(conv1d(v2a, p["w1_v2a"], p["b1_v2a"])),
                    p["w2_v2a"], p["b2_v2a"])
    pred_a = conv1d(gelu(conv1d(a2v, p["w1_a2v"], p["b1_a2v"])),
                    p["w2_a2v"], p["b2_a2v"])
    return jnp.swapaxes(pred_v, 1, 2), jnp.swapaxes(pred_a, 1, 2)


if __name__ == "__main__":
    key = jax.random.PRNGKey(0)
    k_param, k_v, k_a, k_fwd = jax.random.split(key, 4)

    B, NUM_CAPS = 2, 16
    LATENT, TIMESTEPS = 512, 500

    v_caps = jax.random.normal(k_v, (B, NUM_CAPS, FEAT), jnp.float32)
    a_caps = jax.random.normal(k_a, (B, NUM_CAPS, FEAT), jnp.float32)

    params = init_params(k_param, LATENT, TIMESTEPS)
    kparams = prepare_kernel_params(params)

    # Sample the stochastic forward inputs once so kernel and reference see identical values.
    t_emb, ac_t, noise_v, noise_a = sample_forward_randomness(k_fwd, params, B, NUM_CAPS)

    pred_v, pred_a = local_aware_diffusion_pallas(
        v_caps, a_caps, t_emb, ac_t, noise_v, noise_a, kparams)
    pred_v, pred_a = jax.block_until_ready((pred_v, pred_a))

    ref_v, ref_a = reference_forward(
        v_caps, a_caps, t_emb, ac_t, noise_v, noise_a, params)

    assert pred_v.shape == (B, NUM_CAPS, FEAT), pred_v.shape
    assert pred_a.shape == (B, NUM_CAPS, FEAT), pred_a.shape
    assert jnp.allclose(pred_v, ref_v, rtol=1e-3, atol=1e-3), \
        float(jnp.max(jnp.abs(pred_v - ref_v)))
    assert jnp.allclose(pred_a, ref_a, rtol=1e-3, atol=1e-3), \
        float(jnp.max(jnp.abs(pred_a - ref_a)))

    print("KERNEL_OK")
</pallas_src>

<mosaic_0001>
module attributes {stable_mosaic.version = 11 : i64} {
  func.func @diffusion_kernel(%arg0: memref<2x16x32xf32, #tpu.memory_space<vmem>>, %arg1: memref<2x16x32xf32, #tpu.memory_space<vmem>>, %arg2: memref<2x16x32xf32, #tpu.memory_space<vmem>>, %arg3: memref<2x16x32xf32, #tpu.memory_space<vmem>>, %arg4: memref<2x512xf32, #tpu.memory_space<vmem>>, %arg5: memref<2x1xf32, #tpu.memory_space<vmem>>, %arg6: memref<512x32xf32, #tpu.memory_space<vmem>>, %arg7: memref<1x32xf32, #tpu.memory_space<vmem>>, %arg8: memref<3x4x32x128xf32, #tpu.memory_space<vmem>>, %arg9: memref<1x128xf32, #tpu.memory_space<vmem>>, %arg10: memref<3x128x64xf32, #tpu.memory_space<vmem>>, %arg11: memref<1x64xf32, #tpu.memory_space<vmem>>, %arg12: memref<2x16x32xf32, #tpu.memory_space<vmem>>, %arg13: memref<2x16x32xf32, #tpu.memory_space<vmem>>) attributes {dimension_semantics = [], scalar_prefetch = 0 : i64, scratch_operands = 0 : i64, tpu.core_type = #tpu.core_type<tc>} {
    %c0 = arith.constant 0 : index
    %c0_0 = arith.constant 0 : index
    %c0_1 = arith.constant 0 : index
    %0 = vector.load %arg0[%c0, %c0_0, %c0_1] : memref<2x16x32xf32, #tpu.memory_space<vmem>>, vector<2x16x32xf32>
    %c0_2 = arith.constant 0 : index
    %c0_3 = arith.constant 0 : index
    %c0_4 = arith.constant 0 : index
    %1 = vector.load %arg1[%c0_2, %c0_3, %c0_4] : memref<2x16x32xf32, #tpu.memory_space<vmem>>, vector<2x16x32xf32>
    %c0_5 = arith.constant 0 : index
    %c0_6 = arith.constant 0 : index
    %2 = vector.load %arg4[%c0_5, %c0_6] : memref<2x512xf32, #tpu.memory_space<vmem>>, vector<2x512xf32>
    %c0_7 = arith.constant 0 : index
    %c0_8 = arith.constant 0 : index
    %3 = vector.load %arg6[%c0_7, %c0_8] : memref<512x32xf32, #tpu.memory_space<vmem>>, vector<512x32xf32>
    %cst = arith.constant dense<0.000000e+00> : vector<2x32xf32>
    %4 = tpu.matmul %2, %3, %cst {dimension_numbers = #tpu.dot_dimension_numbers<[1], [0], [0], [1], [0, 0, 1, 1], [], []>} : vector<2x512xf32>, vector<512x32xf32>, vector<2x32xf32> -> vector<2x32xf32>
    %c0_9 = arith.constant 0 : index
    %c0_10 = arith.constant 0 : index
    %5 = vector.load %arg7[%c0_9, %c0_10] : memref<1x32xf32, #tpu.memory_space<vmem>>, vector<1x32xf32>
    %6 = vector.broadcast %5 : vector<1x32xf32> to vector<2x32xf32>
    %7 = arith.addf %4, %6 : vector<2x32xf32>
    %cst_11 = arith.constant 0.000000e+00 : f32
    %8 = vector.broadcast %cst_11 : f32 to vector<2x32xf32>
    %9 = arith.subf %8, %7 : vector<2x32xf32>
    %10 = math.exp %9 : vector<2x32xf32>
    %cst_12 = arith.constant 1.000000e+00 : f32
    %11 = vector.broadcast %cst_12 : f32 to vector<2x32xf32>
    %12 = arith.addf %11, %10 : vector<2x32xf32>
    %cst_13 = arith.constant 1.000000e+00 : f32
    %13 = vector.broadcast %cst_13 : f32 to vector<2x32xf32>
    %14 = arith.divf %13, %12 : vector<2x32xf32>
    %c0_14 = arith.constant 0 : index
    %c0_15 = arith.constant 0 : index
    %15 = vector.load %arg5[%c0_14, %c0_15] : memref<2x1xf32, #tpu.memory_space<vmem>>, vector<2x1xf32>
    %16 = vector.shape_cast %15 : vector<2x1xf32> to vector<2x1x1xf32>
    %17 = math.sqrt %16 : vector<2x1x1xf32>
    %cst_16 = arith.constant 1.000000e+00 : f32
    %18 = vector.broadcast %cst_16 : f32 to vector<2x1x1xf32>
    %19 = arith.subf %18, %16 : vector<2x1x1xf32>
    %20 = math.sqrt %19 : vector<2x1x1xf32>
    %21 = vector.shape_cast %14 : vector<2x32xf32> to vector<2x1x32xf32>
    %22 = vector.broadcast %17 : vector<2x1x1xf32> to vector<2x16x32xf32>
    %23 = arith.mulf %22, %0 : vector<2x16x32xf32>
    %c0_17 = arith.constant 0 : index
    %c0_18 = arith.constant 0 : index
    %c0_19 = arith.constant 0 : index
    %24 = vector.load %arg2[%c0_17, %c0_18, %c0_19] : memref<2x16x32xf32, #tpu.memory_space<vmem>>, vector<2x16x32xf32>
    %25 = vector.broadcast %21 : vector<2x1x32xf32> to vector<2x16x32xf32>
    %26 = arith.mulf %24, %25 : vector<2x16x32xf32>
    %27 = vector.broadcast %20 : vector<2x1x1xf32> to vector<2x16x32xf32>
    %28 = arith.mulf %27, %26 : vector<2x16x32xf32>
    %29 = arith.addf %23, %28 : vector<2x16x32xf32>
    %30 = vector.broadcast %17 : vector<2x1x1xf32> to vector<2x16x32xf32>
    %31 = arith.mulf %30, %1 : vector<2x16x32xf32>
    %c0_20 = arith.constant 0 : index
    %c0_21 = arith.constant 0 : index
    %c0_22 = arith.constant 0 : index
    %32 = vector.load %arg3[%c0_20, %c0_21, %c0_22] : memref<2x16x32xf32, #tpu.memory_space<vmem>>, vector<2x16x32xf32>
    %33 = vector.broadcast %21 : vector<2x1x32xf32> to vector<2x16x32xf32>
    %34 = arith.mulf %32, %33 : vector<2x16x32xf32>
    %35 = vector.broadcast %20 : vector<2x1x1xf32> to vector<2x16x32xf32>
    %36 = arith.mulf %35, %34 : vector<2x16x32xf32>
    %37 = arith.addf %31, %36 : vector<2x16x32xf32>
    %38 = vector.shape_cast %29 : vector<2x16x32xf32> to vector<32x32xf32>
    %39 = vector.shape_cast %1 : vector<2x16x32xf32> to vector<32x32xf32>
    %40 = vector.shape_cast %37 : vector<2x16x32xf32> to vector<32x32xf32>
    %41 = vector.shape_cast %0 : vector<2x16x32xf32> to vector<32x32xf32>
    %c0_23 = arith.constant 0 : index
    %c0_24 = arith.constant 0 : index
    %c0_25 = arith.constant 0 : index
    %c0_26 = arith.constant 0 : index
    %42 = vector.load %arg8[%c0_23, %c0_24, %c0_25, %c0_26] : memref<3x4x32x128xf32, #tpu.memory_space<vmem>>, vector<1x1x32x128xf32>
    %43 = vector.shape_cast %42 : vector<1x1x32x128xf32> to vector<32x128xf32>
    %cst_27 = arith.constant dense<0.000000e+00> : vector<32x128xf32>
    %44 = tpu.matmul %38, %43, %cst_27 {dimension_numbers = #tpu.dot_dimension_numbers<[1], [0], [0], [1], [0, 0, 1, 1], [], []>} : vector<32x32xf32>, vector<32x128xf32>, vector<32x128xf32> -> vector<32x128xf32>
    %c0_28 = arith.constant 0 : index
    %c1 = arith.constant 1 : index
    %c0_29 = arith.constant 0 : index
    %c0_30 = arith.constant 0 : index
    %45 = vector.load %arg8[%c0_28, %c1, %c0_29, %c0_30] : memref<3x4x32x128xf32, #tpu.memory_space<vmem>>, vector<1x1x32x128xf32>
    %46 = vector.shape_cast %45 : vector<1x1x32x128xf32> to vector<32x128xf32>
    %cst_31 = arith.constant dense<0.000000e+00> : vector<32x128xf32>
    %47 = tpu.matmul %39, %46, %cst_31 {dimension_numbers = #tpu.dot_dimension_numbers<[1], [0], [0], [1], [0, 0, 1, 1], [], []>} : vector<32x32xf32>, vector<32x128xf32>, vector<32x128xf32> -> vector<32x128xf32>
    %48 = arith.addf %44, %47 : vector<32x128xf32>
    %c0_32 = arith.constant 0 : index
    %c2 = arith.constant 2 : index
    %c0_33 = arith.constant 0 : index
    %c0_34 = arith.constant 0 : index
    %49 = vector.load %arg8[%c0_32, %c2, %c0_33, %c0_34] : memref<3x4x32x128xf32, #tpu.memory_space<vmem>>, vector<1x1x32x128xf32>
    %50 = vector.shape_cast %49 : vector<1x1x32x128xf32> to vector<32x128xf32>
    %cst_35 = arith.constant dense<0.000000e+00> : vector<32x128xf32>
    %51 = tpu.matmul %40, %50, %cst_35 {dimension_numbers = #tpu.dot_dimension_numbers<[1], [0], [0], [1], [0, 0, 1, 1], [], []>} : vector<32x32xf32>, vector<32x128xf32>, vector<32x128xf32> -> vector<32x128xf32>
    %52 = arith.addf %48, %51 : vector<32x128xf32>
    %c0_36 = arith.constant 0 : index
    %c3 = arith.constant 3 : index
    %c0_37 = arith.constant 0 : index
    %c0_38 = arith.constant 0 : index
    %53 = vector.load %arg8[%c0_36, %c3, %c0_37, %c0_38] : memref<3x4x32x128xf32, #tpu.memory_space<vmem>>, vector<1x1x32x128xf32>
    %54 = vector.shape_cast %53 : vector<1x1x32x128xf32> to vector<32x128xf32>
    %cst_39 = arith.constant dense<0.000000e+00> : vector<32x128xf32>
    %55 = tpu.matmul %41, %54, %cst_39 {dimension_numbers = #tpu.dot_dimension_numbers<[1], [0], [0], [1], [0, 0, 1, 1], [], []>} : vector<32x32xf32>, vector<32x128xf32>, vector<32x128xf32> -> vector<32x128xf32>
    %56 = arith.addf %52, %55 : vector<32x128xf32>
    %57 = vector.shape_cast %56 : vector<32x128xf32> to vector<2x16x128xf32>
    %cst_40 = arith.constant 0.000000e+00 : f32
    %58 = vector.broadcast %cst_40 : f32 to vector<2x1x128xf32>
    %59 = vector.extract_strided_slice %57 {offsets = [0, 0, 0], sizes = [2, 15, 128], strides = [1, 1, 1]} : vector<2x16x128xf32> to vector<2x15x128xf32>
    %60 = tpu.concatenate %58, %59 in 1 : vector<2x1x128xf32>, vector<2x15x128xf32> -> vector<2x16x128xf32>
    %c1_41 = arith.constant 1 : index
    %c0_42 = arith.constant 0 : index
    %c0_43 = arith.constant 0 : index
    %c0_44 = arith.constant 0 : index
    %61 = vector.load %arg8[%c1_41, %c0_42, %c0_43, %c0_44] : memref<3x4x32x128xf32, #tpu.memory_space<vmem>>, vector<1x1x32x128xf32>
    %62 = vector.shape_cast %61 : vector<1x1x32x128xf32> to vector<32x128xf32>
    %cst_45 = arith.constant dense<0.000000e+00> : vector<32x128xf32>
    %63 = tpu.matmul %38, %62, %cst_45 {dimension_numbers = #tpu.dot_dimension_numbers<[1], [0], [0], [1], [0, 0, 1, 1], [], []>} : vector<32x32xf32>, vector<32x128xf32>, vector<32x128xf32> -> vector<32x128xf32>
    %c1_46 = arith.constant 1 : index
    %c1_47 = arith.constant 1 : index
    %c0_48 = arith.constant 0 : index
    %c0_49 = arith.constant 0 : index
    %64 = vector.load %arg8[%c1_46, %c1_47, %c0_48, %c0_49] : memref<3x4x32x128xf32, #tpu.memory_space<vmem>>, vector<1x1x32x128xf32>
    %65 = vector.shape_cast %64 : vector<1x1x32x128xf32> to vector<32x128xf32>
    %cst_50 = arith.constant dense<0.000000e+00> : vector<32x128xf32>
    %66 = tpu.matmul %39, %65, %cst_50 {dimension_numbers = #tpu.dot_dimension_numbers<[1], [0], [0], [1], [0, 0, 1, 1], [], []>} : vector<32x32xf32>, vector<32x128xf32>, vector<32x128xf32> -> vector<32x128xf32>
    %67 = arith.addf %63, %66 : vector<32x128xf32>
    %c1_51 = arith.constant 1 : index
    %c2_52 = arith.constant 2 : index
    %c0_53 = arith.constant 0 : index
    %c0_54 = arith.constant 0 : index
    %68 = vector.load %arg8[%c1_51, %c2_52, %c0_53, %c0_54] : memref<3x4x32x128xf32, #tpu.memory_space<vmem>>, vector<1x1x32x128xf32>
    %69 = vector.shape_cast %68 : vector<1x1x32x128xf32> to vector<32x128xf32>
    %cst_55 = arith.constant dense<0.000000e+00> : vector<32x128xf32>
    %70 = tpu.matmul %40, %69, %cst_55 {dimension_numbers = #tpu.dot_dimension_numbers<[1], [0], [0], [1], [0, 0, 1, 1], [], []>} : vector<32x32xf32>, vector<32x128xf32>, vector<32x128xf32> -> vector<32x128xf32>
    %71 = arith.addf %67, %70 : vector<32x128xf32>
    %c1_56 = arith.constant 1 : index
    %c3_57 = arith.constant 3 : index
    %c0_58 = arith.constant 0 : index
    %c0_59 = arith.constant 0 : index
    %72 = vector.load %arg8[%c1_56, %c3_57, %c0_58, %c0_59] : memref<3x4x32x128xf32, #tpu.memory_space<vmem>>, vector<1x1x32x128xf32>
    %73 = vector.shape_cast %72 : vector<1x1x32x128xf32> to vector<32x128xf32>
    %cst_60 = arith.constant dense<0.000000e+00> : vector<32x128xf32>
    %74 = tpu.matmul %41, %73, %cst_60 {dimension_numbers = #tpu.dot_dimension_numbers<[1], [0], [0], [1], [0, 0, 1, 1], [], []>} : vector<32x32xf32>, vector<32x128xf32>, vector<32x128xf32> -> vector<32x128xf32>
    %75 = arith.addf %71, %74 : vector<32x128xf32>
    %76 = vector.shape_cast %75 : vector<32x128xf32> to vector<2x16x128xf32>
    %77 = arith.addf %60, %76 : vector<2x16x128xf32>
    %c2_61 = arith.constant 2 : index
    %c0_62 = arith.constant 0 : index
    %c0_63 = arith.constant 0 : index
    %c0_64 = arith.constant 0 : index
    %78 = vector.load %arg8[%c2_61, %c0_62, %c0_63, %c0_64] : memref<3x4x32x128xf32, #tpu.memory_space<vmem>>, vector<1x1x32x128xf32>
    %79 = vector.shape_cast %78 : vector<1x1x32x128xf32> to vector<32x128xf32>
    %cst_65 = arith.constant dense<0.000000e+00> : vector<32x128xf32>
    %80 = tpu.matmul %38, %79, %cst_65 {dimension_numbers = #tpu.dot_dimension_numbers<[1], [0], [0], [1], [0, 0, 1, 1], [], []>} : vector<32x32xf32>, vector<32x128xf32>, vector<32x128xf32> -> vector<32x128xf32>
    %c2_66 = arith.constant 2 : index
    %c1_67 = arith.constant 1 : index
    %c0_68 = arith.constant 0 : index
    %c0_69 = arith.constant 0 : index
    %81 = vector.load %arg8[%c2_66, %c1_67, %c0_68, %c0_69] : memref<3x4x32x128xf32, #tpu.memory_space<vmem>>, vector<1x1x32x128xf32>
    %82 = vector.shape_cast %81 : vector<1x1x32x128xf32> to vector<32x128xf32>
    %cst_70 = arith.constant dense<0.000000e+00> : vector<32x128xf32>
    %83 = tpu.matmul %39, %82, %cst_70 {dimension_numbers = #tpu.dot_dimension_numbers<[1], [0], [0], [1], [0, 0, 1, 1], [], []>} : vector<32x32xf32>, vector<32x128xf32>, vector<32x128xf32> -> vector<32x128xf32>
    %84 = arith.addf %80, %83 : vector<32x128xf32>
    %c2_71 = arith.constant 2 : index
    %c2_72 = arith.constant 2 : index
    %c0_73 = arith.constant 0 : index
    %c0_74 = arith.constant 0 : index
    %85 = vector.load %arg8[%c2_71, %c2_72, %c0_73, %c0_74] : memref<3x4x32x128xf32, #tpu.memory_space<vmem>>, vector<1x1x32x128xf32>
    %86 = vector.shape_cast %85 : vector<1x1x32x128xf32> to vector<32x128xf32>
    %cst_75 = arith.constant dense<0.000000e+00> : vector<32x128xf32>
    %87 = tpu.matmul %40, %86, %cst_75 {dimension_numbers = #tpu.dot_dimension_numbers<[1], [0], [0], [1], [0, 0, 1, 1], [], []>} : vector<32x32xf32>, vector<32x128xf32>, vector<32x128xf32> -> vector<32x128xf32>
    %88 = arith.addf %84, %87 : vector<32x128xf32>
    %c2_76 = arith.constant 2 : index
    %c3_77 = arith.constant 3 : index
    %c0_78 = arith.constant 0 : index
    %c0_79 = arith.constant 0 : index
    %89 = vector.load %arg8[%c2_76, %c3_77, %c0_78, %c0_79] : memref<3x4x32x128xf32, #tpu.memory_space<vmem>>, vector<1x1x32x128xf32>
    %90 = vector.shape_cast %89 : vector<1x1x32x128xf32> to vector<32x128xf32>
    %cst_80 = arith.constant dense<0.000000e+00> : vector<32x128xf32>
    %91 = tpu.matmul %41, %90, %cst_80 {dimension_numbers = #tpu.dot_dimension_numbers<[1], [0], [0], [1], [0, 0, 1, 1], [], []>} : vector<32x32xf32>, vector<32x128xf32>, vector<32x128xf32> -> vector<32x128xf32>
    %92 = arith.addf %88, %91 : vector<32x128xf32>
    %93 = vector.shape_cast %92 : vector<32x128xf32> to vector<2x16x128xf32>
    %94 = vector.extract_strided_slice %93 {offsets = [0, 1, 0], sizes = [2, 15, 128], strides = [1, 1, 1]} : vector<2x16x128xf32> to vector<2x15x128xf32>
    %cst_81 = arith.constant 0.000000e+00 : f32
    %95 = vector.broadcast %cst_81 : f32 to vector<2x1x128xf32>
    %96 = tpu.concatenate %94, %95 in 1 : vector<2x15x128xf32>, vector<2x1x128xf32> -> vector<2x16x128xf32>
    %97 = arith.addf %77, %96 : vector<2x16x128xf32>
    %c0_82 = arith.constant 0 : index
    %c0_83 = arith.constant 0 : index
    %98 = vector.load %arg9[%c0_82, %c0_83] : memref<1x128xf32, #tpu.memory_space<vmem>>, vector<1x128xf32>
    %99 = vector.shape_cast %98 : vector<1x128xf32> to vector<1x1x128xf32>
    %100 = vector.broadcast %99 : vector<1x1x128xf32> to vector<2x16x128xf32>
    %101 = arith.addf %97, %100 : vector<2x16x128xf32>
    %cst_84 = arith.constant 5.000000e-01 : f32
    %102 = vector.broadcast %cst_84 : f32 to vector<2x16x128xf32>
    %103 = arith.mulf %102, %101 : vector<2x16x128xf32>
    %cst_85 = arith.constant 0.707106769 : f32
    %104 = vector.broadcast %cst_85 : f32 to vector<2x16x128xf32>
    %105 = arith.mulf %101, %104 : vector<2x16x128xf32>
    %106 = math.absf %105 : vector<2x16x128xf32>
    %cst_86 = arith.constant 0.327591091 : f32
    %107 = vector.broadcast %cst_86 : f32 to vector<2x16x128xf32>
    %108 = arith.mulf %107, %106 : vector<2x16x128xf32>
    %cst_87 = arith.constant 1.000000e+00 : f32
    %109 = vector.broadcast %cst_87 : f32 to vector<2x16x128xf32>
    %110 = arith.addf %109, %108 : vector<2x16x128xf32>
    %cst_88 = arith.constant 1.000000e+00 : f32
    %111 = vector.broadcast %cst_88 : f32 to vector<2x16x128xf32>
    %112 = arith.divf %111, %110 : vector<2x16x128xf32>
    %cst_89 = arith.constant 1.06140542 : f32
    %113 = vector.broadcast %cst_89 : f32 to vector<2x16x128xf32>
    %114 = arith.mulf %113, %112 : vector<2x16x128xf32>
    %cst_90 = arith.constant -1.45315206 : f32
    %115 = vector.broadcast %cst_90 : f32 to vector<2x16x128xf32>
    %116 = arith.addf %114, %115 : vector<2x16x128xf32>
    %117 = arith.mulf %116, %112 : vector<2x16x128xf32>
    %cst_91 = arith.constant 1.42141378 : f32
    %118 = vector.broadcast %cst_91 : f32 to vector<2x16x128xf32>
    %119 = arith.addf %117, %118 : vector<2x16x128xf32>
    %120 = arith.mulf %119, %112 : vector<2x16x128xf32>
    %cst_92 = arith.constant -0.284496725 : f32
    %121 = vector.broadcast %cst_92 : f32 to vector<2x16x128xf32>
    %122 = arith.addf %120, %121 : vector<2x16x128xf32>
    %123 = arith.mulf %122, %112 : vector<2x16x128xf32>
    %cst_93 = arith.constant 0.254829586 : f32
    %124 = vector.broadcast %cst_93 : f32 to vector<2x16x128xf32>
    %125 = arith.addf %123, %124 : vector<2x16x128xf32>
    %126 = arith.mulf %125, %112 : vector<2x16x128xf32>
    %127 = arith.mulf %106, %106 : vector<2x16x128xf32>
    %cst_94 = arith.constant 0.000000e+00 : f32
    %128 = vector.broadcast %cst_94 : f32 to vector<2x16x128xf32>
    %129 = arith.subf %128, %127 : vector<2x16x128xf32>
    %130 = math.exp %129 : vector<2x16x128xf32>
    %131 = arith.mulf %126, %130 : vector<2x16x128xf32>
    %cst_95 = arith.constant 1.000000e+00 : f32
    %132 = vector.broadcast %cst_95 : f32 to vector<2x16x128xf32>
    %133 = arith.subf %132, %131 : vector<2x16x128xf32>
    %cst_96 = arith.constant 0.000000e+00 : f32
    %134 = vector.broadcast %cst_96 : f32 to vector<2x16x128xf32>
    %135 = arith.cmpf oge, %105, %134 : vector<2x16x128xf32>
    %cst_97 = arith.constant 0.000000e+00 : f32
    %136 = vector.broadcast %cst_97 : f32 to vector<2x16x128xf32>
    %137 = arith.subf %136, %133 : vector<2x16x128xf32>
    %138 = arith.select %135, %133, %137 : vector<2x16x128xi1>, vector<2x16x128xf32>
    %cst_98 = arith.constant 1.000000e+00 : f32
    %139 = vector.broadcast %cst_98 : f32 to vector<2x16x128xf32>
    %140 = arith.addf %139, %138 : vector<2x16x128xf32>
    %141 = arith.mulf %103, %140 : vector<2x16x128xf32>
    %142 = vector.shape_cast %141 : vector<2x16x128xf32> to vector<32x128xf32>
    %c0_99 = arith.constant 0 : index
    %c0_100 = arith.constant 0 : index
    %c0_101 = arith.constant 0 : index
    %143 = vector.load %arg10[%c0_99, %c0_100, %c0_101] : memref<3x128x64xf32, #tpu.memory_space<vmem>>, vector<1x128x64xf32>
    %144 = vector.shape_cast %143 : vector<1x128x64xf32> to vector<128x64xf32>
    %cst_102 = arith.constant dense<0.000000e+00> : vector<32x64xf32>
    %145 = tpu.matmul %142, %144, %cst_102 {dimension_numbers = #tpu.dot_dimension_numbers<[1], [0], [0], [1], [0, 0, 1, 1], [], []>} : vector<32x128xf32>, vector<128x64xf32>, vector<32x64xf32> -> vector<32x64xf32>
    %146 = vector.shape_cast %145 : vector<32x64xf32> to vector<2x16x64xf32>
    %cst_103 = arith.constant 0.000000e+00 : f32
    %147 = vector.broadcast %cst_103 : f32 to vector<2x1x64xf32>
    %148 = vector.extract_strided_slice %146 {offsets = [0, 0, 0], sizes = [2, 15, 64], strides = [1, 1, 1]} : vector<2x16x64xf32> to vector<2x15x64xf32>
    %149 = tpu.concatenate %147, %148 in 1 : vector<2x1x64xf32>, vector<2x15x64xf32> -> vector<2x16x64xf32>
    %c1_104 = arith.constant 1 : index
    %c0_105 = arith.constant 0 : index
    %c0_106 = arith.constant 0 : index
    %150 = vector.load %arg10[%c1_104, %c0_105, %c0_106] : memref<3x128x64xf32, #tpu.memory_space<vmem>>, vector<1x128x64xf32>
    %151 = vector.shape_cast %150 : vector<1x128x64xf32> to vector<128x64xf32>
    %cst_107 = arith.constant dense<0.000000e+00> : vector<32x64xf32>
    %152 = tpu.matmul %142, %151, %cst_107 {dimension_numbers = #tpu.dot_dimension_numbers<[1], [0], [0], [1], [0, 0, 1, 1], [], []>} : vector<32x128xf32>, vector<128x64xf32>, vector<32x64xf32> -> vector<32x64xf32>
    %153 = vector.shape_cast %152 : vector<32x64xf32> to vector<2x16x64xf32>
    %154 = arith.addf %149, %153 : vector<2x16x64xf32>
    %c2_108 = arith.constant 2 : index
    %c0_109 = arith.constant 0 : index
    %c0_110 = arith.constant 0 : index
    %155 = vector.load %arg10[%c2_108, %c0_109, %c0_110] : memref<3x128x64xf32, #tpu.memory_space<vmem>>, vector<1x128x64xf32>
    %156 = vector.shape_cast %155 : vector<1x128x64xf32> to vector<128x64xf32>
    %cst_111 = arith.constant dense<0.000000e+00> : vector<32x64xf32>
    %157 = tpu.matmul %142, %156, %cst_111 {dimension_numbers = #tpu.dot_dimension_numbers<[1], [0], [0], [1], [0, 0, 1, 1], [], []>} : vector<32x128xf32>, vector<128x64xf32>, vector<32x64xf32> -> vector<32x64xf32>
    %158 = vector.shape_cast %157 : vector<32x64xf32> to vector<2x16x64xf32>
    %159 = vector.extract_strided_slice %158 {offsets = [0, 1, 0], sizes = [2, 15, 64], strides = [1, 1, 1]} : vector<2x16x64xf32> to vector<2x15x64xf32>
    %cst_112 = arith.constant 0.000000e+00 : f32
    %160 = vector.broadcast %cst_112 : f32 to vector<2x1x64xf32>
    %161 = tpu.concatenate %159, %160 in 1 : vector<2x15x64xf32>, vector<2x1x64xf32> -> vector<2x16x64xf32>
    %162 = arith.addf %154, %161 : vector<2x16x64xf32>
    %c0_113 = arith.constant 0 : index
    %c0_114 = arith.constant 0 : index
    %163 = vector.load %arg11[%c0_113, %c0_114] : memref<1x64xf32, #tpu.memory_space<vmem>>, vector<1x64xf32>
    %164 = vector.shape_cast %163 : vector<1x64xf32> to vector<1x1x64xf32>
    %165 = vector.broadcast %164 : vector<1x1x64xf32> to vector<2x16x64xf32>
    %166 = arith.addf %162, %165 : vector<2x16x64xf32>
    %167 = vector.extract_strided_slice %166 {offsets = [0, 0, 0], sizes = [2, 16, 32], strides = [1, 1, 1]} : vector<2x16x64xf32> to vector<2x16x32xf32>
    %c0_115 = arith.constant 0 : index
    %c0_116 = arith.constant 0 : index
    %c0_117 = arith.constant 0 : index
    %168 = vector.load %arg12[%c0_115, %c0_116, %c0_117] : memref<2x16x32xf32, #tpu.memory_space<vmem>>, vector<2x16x32xf32>
    tpu.vector_store %arg12[%c0_115, %c0_116, %c0_117], %167 {strides = array<i32>} : memref<2x16x32xf32, #tpu.memory_space<vmem>>, vector<2x16x32xf32>,
    %169 = vector.extract_strided_slice %166 {offsets = [0, 0, 32], sizes = [2, 16, 32], strides = [1, 1, 1]} : vector<2x16x64xf32> to vector<2x16x32xf32>
    %c0_118 = arith.constant 0 : index
    %c0_119 = arith.constant 0 : index
    %c0_120 = arith.constant 0 : index
    %170 = vector.load %arg13[%c0_118, %c0_119, %c0_120] : memref<2x16x32xf32, #tpu.memory_space<vmem>>, vector<2x16x32xf32>
    tpu.vector_store %arg13[%c0_118, %c0_119, %c0_120], %169 {strides = array<i32>} : memref<2x16x32xf32, #tpu.memory_space<vmem>>, vector<2x16x32xf32>,
    return
  }
}

</mosaic_0001>

<llo_original>
// kernel: local_aware_diffusion_pallas.1
$region0: #{local_aware_diffusion_pallas.1}
  #allocation0 [shape = 'u32[]', space=smem, size = 0x4, offset = 0x4, fixed_abs, tag = 'smem constant byte address 0x4 - core index']
  #allocation1 [shape = 'u32[144,128]{1,0:T(1,128)}', space=vmem, size = 0x12000, scoped, tag = 'internal scratch']
  %s0 = inlined_call_operand.vmem [shape: f32[2,16,32], index: 0, kind: input, shape index: {}]
  %s1 = inlined_call_operand.vmem [shape: f32[2,16,32], index: 1, kind: input, shape index: {}]
  %s2 = inlined_call_operand.vmem [shape: f32[2,16,32], index: 2, kind: input, shape index: {}]
  %s3 = inlined_call_operand.vmem [shape: f32[2,16,32], index: 3, kind: input, shape index: {}]
  %s4 = inlined_call_operand.vmem [shape: f32[2,512], index: 4, kind: input, shape index: {}]
  %s5 = inlined_call_operand.vmem [shape: f32[2,1], index: 5, kind: input, shape index: {}]
  %s6 = inlined_call_operand.vmem [shape: f32[512,32], index: 6, kind: input, shape index: {}]
  %s7 = inlined_call_operand.vmem [shape: f32[1,32], index: 7, kind: input, shape index: {}]
  %s8 = inlined_call_operand.vmem [shape: f32[3,4,32,128], index: 8, kind: input, shape index: {}]
  %s9 = inlined_call_operand.vmem [shape: f32[1,128], index: 9, kind: input, shape index: {}]
  %s10 = inlined_call_operand.vmem [shape: f32[3,128,64], index: 10, kind: input, shape index: {}]
  %s11 = inlined_call_operand.vmem [shape: f32[1,64], index: 11, kind: input, shape index: {}]
  %s12 = inlined_call_operand.hbm [shape: f32[2,16,32], index: 12, kind: output, shape index: {0}]
  %s13 = inlined_call_operand.hbm [shape: f32[2,16,32], index: 13, kind: output, shape index: {1}]
  %14 = xla_tuple %s12, %s13
  %s15 = sld [smem:[#allocation0]]
  $region66: #{local_aware_diffusion_pallas.1} parent=0
    _
  %s17 = ssub.s32 1, %s15
  %s18 = scalar_select 0, %s17, %s15
  $region1: #{local_aware_diffusion_pallas.1} parent=0
    #allocation2 [shape = 'u8[16384]{0}', space=vmem, size = 0x4000, scoped, tag = 'output window, operand 0, single buffered']
    #allocation3 [shape = 's32[1]{0}', space=sflag, size = 0x4, scoped, tag = 'scoped memory for local_aware_diffusion_pallas.1']
    #allocation4 [shape = 'u8[16384]{0}', space=vmem, size = 0x4000, scoped, tag = 'output window, operand 1, single buffered']
    #allocation5 [shape = 's32[1]{0}', space=sflag, size = 0x4, scoped, tag = 'scoped memory for local_aware_diffusion_pallas.1']
    %19 = vsyncpa [#allocation3], 0
    %20 = vsyncpa [#allocation5], 0
    // Predicated region
    $region2: #{local_aware_diffusion_pallas.1} parent=1 // pred_check
      _
    $region3: #{local_aware_diffusion_pallas.1} parent=1 // pred_check_branch
      %22 = sbr.rel (0) target = $region5
    $region4: #{local_aware_diffusion_pallas.1} parent=1 // pred_region
      _
    $region5: #{local_aware_diffusion_pallas.1} parent=1 // pred_fallthru
      _
    // Predicated region
    $region6: #{local_aware_diffusion_pallas.1} parent=1 // pred_check
      _
    $region7: #{local_aware_diffusion_pallas.1} parent=1 // pred_check_branch
      %24 = sbr.rel (0) target = $region9
    $region8: #{local_aware_diffusion_pallas.1} parent=1 // pred_region
      _
    $region9: #{local_aware_diffusion_pallas.1} parent=1 // pred_fallthru
      _
    // Predicated region
    $region10: #{local_aware_diffusion_pallas.1} parent=1 // pred_check
      _
    $region11: #{local_aware_diffusion_pallas.1} parent=1 // pred_check_branch
      %26 = sbr.rel (0) target = $region13
    $region12: #{local_aware_diffusion_pallas.1} parent=1 // pred_region
      _
    $region13: #{local_aware_diffusion_pallas.1} parent=1 // pred_fallthru
      _
    // Predicated region
    $region14: #{local_aware_diffusion_pallas.1} parent=1 // pred_check
      _
    $region15: #{local_aware_diffusion_pallas.1} parent=1 // pred_check_branch
      %28 = sbr.rel (0) target = $region17
    $region16: #{local_aware_diffusion_pallas.1} parent=1 // pred_region
      _
    $region17: #{local_aware_diffusion_pallas.1} parent=1 // pred_fallthru
      _
    // Predicated region
    $region18: #{local_aware_diffusion_pallas.1} parent=1 // pred_check
      _
    $region19: #{local_aware_diffusion_pallas.1} parent=1 // pred_check_branch
      %30 = sbr.rel (0) target = $region21
    $region20: #{local_aware_diffusion_pallas.1} parent=1 // pred_region
      _
    $region21: #{local_aware_diffusion_pallas.1} parent=1 // pred_fallthru
      _
    // Predicated region
    $region22: #{local_aware_diffusion_pallas.1} parent=1 // pred_check
      _
    $region23: #{local_aware_diffusion_pallas.1} parent=1 // pred_check_branch
      %32 = sbr.rel (0) target = $region25
    $region24: #{local_aware_diffusion_pallas.1} parent=1 // pred_region
      _
    $region25: #{local_aware_diffusion_pallas.1} parent=1 // pred_fallthru
      _
    // Predicated region
    $region26: #{local_aware_diffusion_pallas.1} parent=1 // pred_check
      _
    $region27: #{local_aware_diffusion_pallas.1} parent=1 // pred_check_branch
      %34 = sbr.rel (0) target = $region29
    $region28: #{local_aware_diffusion_pallas.1} parent=1 // pred_region
      _
    $region29: #{local_aware_diffusion_pallas.1} parent=1 // pred_fallthru
      _
    // Predicated region
    $region30: #{local_aware_diffusion_pallas.1} parent=1 // pred_check
      _
    $region31: #{local_aware_diffusion_pallas.1} parent=1 // pred_check_branch
      %36 = sbr.rel (0) target = $region33
    $region32: #{local_aware_diffusion_pallas.1} parent=1 // pred_region
      _
    $region33: #{local_aware_diffusion_pallas.1} parent=1 // pred_fallthru
      _
    // Predicated region
    $region34: #{local_aware_diffusion_pallas.1} parent=1 // pred_check
      _
    $region35: #{local_aware_diffusion_pallas.1} parent=1 // pred_check_branch
      %38 = sbr.rel (0) target = $region37
    $region36: #{local_aware_diffusion_pallas.1} parent=1 // pred_region
      _
    $region37: #{local_aware_diffusion_pallas.1} parent=1 // pred_fallthru
      _
    // Predicated region
    $region38: #{local_aware_diffusion_pallas.1} parent=1 // pred_check
      _
    $region39: #{local_aware_diffusion_pallas.1} parent=1 // pred_check_branch
      %40 = sbr.rel (0) target = $region41
    $region40: #{local_aware_diffusion_pallas.1} parent=1 // pred_region
      _
    $region41: #{local_aware_diffusion_pallas.1} parent=1 // pred_fallthru
      _
    // Predicated region
    $region42: #{local_aware_diffusion_pallas.1} parent=1 // pred_check
      _
    $region43: #{local_aware_diffusion_pallas.1} parent=1 // pred_check_branch
      %42 = sbr.rel (0) target = $region45
    $region44: #{local_aware_diffusion_pallas.1} parent=1 // pred_region
      _
    $region45: #{local_aware_diffusion_pallas.1} parent=1 // pred_fallthru
      _
    // Predicated region
    $region46: #{local_aware_diffusion_pallas.1} parent=1 // pred_check
      _
    $region47: #{local_aware_diffusion_pallas.1} parent=1 // pred_check_branch
      %44 = sbr.rel (0) target = $region49
    $region48: #{local_aware_diffusion_pallas.1} parent=1 // pred_region
      _
    $region49: #{local_aware_diffusion_pallas.1} parent=1 // pred_fallthru
      _
    %v45 = vld [vmem:[%s0] sm:$0xff]
    %v46 = vld [vmem:[%s0 + $0x8] sm:$0xff]
    %v47 = vld [vmem:[%s0 + $0x10] sm:$0xff]
    %v48 = vld [vmem:[%s0 + $0x18] sm:$0xff]
    %v49 = vld [vmem:[%s1] sm:$0xff]
    %v50 = vld [vmem:[%s1 + $0x8] sm:$0xff]
    %v51 = vld [vmem:[%s1 + $0x10] sm:$0xff]
    %v52 = vld [vmem:[%s1 + $0x18] sm:$0xff]
    %v53 = vld [vmem:[%s4] sm:$0xff]
    %v54 = vld [vmem:[%s6] sm:$0xff]
    %v55 = vld [vmem:[%s6 + $0x8] sm:$0xff]
    %v56 = vld [vmem:[%s6 + $0x10] sm:$0xff]
    %v57 = vld [vmem:[%s6 + $0x18] sm:$0xff]
    %v58 = vld [vmem:[%s6 + $0x20] sm:$0xff]
    %v59 = vld [vmem:[%s6 + $0x28] sm:$0xff]
    %v60 = vld [vmem:[%s6 + $0x30] sm:$0xff]
    %v61 = vld [vmem:[%s6 + $0x38] sm:$0xff]
    %v62 = vld [vmem:[%s6 + $0x40] sm:$0xff]
    %v63 = vld [vmem:[%s6 + $0x48] sm:$0xff]
    %v64 = vld [vmem:[%s6 + $0x50] sm:$0xff]
    %v65 = vld [vmem:[%s6 + $0x58] sm:$0xff]
    %v66 = vld [vmem:[%s6 + $0x60] sm:$0xff]
    %v67 = vld [vmem:[%s6 + $0x68] sm:$0xff]
    %v68 = vld [vmem:[%s6 + $0x70] sm:$0xff]
    %v69 = vld [vmem:[%s6 + $0x78] sm:$0xff]
    %v70 = vld [vmem:[%s6 + $0x80] sm:$0xff]
    %v71 = vld [vmem:[%s6 + $0x88] sm:$0xff]
    %v72 = vld [vmem:[%s6 + $0x90] sm:$0xff]
    %v73 = vld [vmem:[%s6 + $0x98] sm:$0xff]
    %v74 = vld [vmem:[%s6 + $0xa0] sm:$0xff]
    %v75 = vld [vmem:[%s6 + $0xa8] sm:$0xff]
    %v76 = vld [vmem:[%s6 + $0xb0] sm:$0xff]
    %v77 = vld [vmem:[%s6 + $0xb8] sm:$0xff]
    %v78 = vld [vmem:[%s6 + $0xc0] sm:$0xff]
    %v79 = vld [vmem:[%s6 + $0xc8] sm:$0xff]
    %v80 = vld [vmem:[%s6 + $0xd0] sm:$0xff]
    %v81 = vld [vmem:[%s6 + $0xd8] sm:$0xff]
    %v82 = vld [vmem:[%s6 + $0xe0] sm:$0xff]
    %v83 = vld [vmem:[%s6 + $0xe8] sm:$0xff]
    %v84 = vld [vmem:[%s6 + $0xf0] sm:$0xff]
    %v85 = vld [vmem:[%s6 + $0xf8] sm:$0xff]
    %v86 = vld [vmem:[%s6 + $0x100] sm:$0xff]
    %v87 = vld [vmem:[%s6 + $0x108] sm:$0xff]
    %v88 = vld [vmem:[%s6 + $0x110] sm:$0xff]
    %v89 = vld [vmem:[%s6 + $0x118] sm:$0xff]
    %v90 = vld [vmem:[%s6 + $0x120] sm:$0xff]
    %v91 = vld [vmem:[%s6 + $0x128] sm:$0xff]
    %v92 = vld [vmem:[%s6 + $0x130] sm:$0xff]
    %v93 = vld [vmem:[%s6 + $0x138] sm:$0xff]
    %v94 = vld [vmem:[%s6 + $0x140] sm:$0xff]
    %v95 = vld [vmem:[%s6 + $0x148] sm:$0xff]
    %v96 = vld [vmem:[%s6 + $0x150] sm:$0xff]
    %v97 = vld [vmem:[%s6 + $0x158] sm:$0xff]
    %v98 = vld [vmem:[%s6 + $0x160] sm:$0xff]
    %v99 = vld [vmem:[%s6 + $0x168] sm:$0xff]
    %v100 = vld [vmem:[%s6 + $0x170] sm:$0xff]
    %v101 = vld [vmem:[%s6 + $0x178] sm:$0xff]
    %v102 = vld [vmem:[%s6 + $0x180] sm:$0xff]
    %v103 = vld [vmem:[%s6 + $0x188] sm:$0xff]
    %v104 = vld [vmem:[%s6 + $0x190] sm:$0xff]
    %v105 = vld [vmem:[%s6 + $0x198] sm:$0xff]
    %v106 = vld [vmem:[%s6 + $0x1a0] sm:$0xff]
    %v107 = vld [vmem:[%s6 + $0x1a8] sm:$0xff]
    %v108 = vld [vmem:[%s6 + $0x1b0] sm:$0xff]
    %v109 = vld [vmem:[%s6 + $0x1b8] sm:$0xff]
    %v110 = vld [vmem:[%s6 + $0x1c0] sm:$0xff]
    %v111 = vld [vmem:[%s6 + $0x1c8] sm:$0xff]
    %v112 = vld [vmem:[%s6 + $0x1d0] sm:$0xff]
    %v113 = vld [vmem:[%s6 + $0x1d8] sm:$0xff]
    %v114 = vld [vmem:[%s6 + $0x1e0] sm:$0xff]
    %v115 = vld [vmem:[%s6 + $0x1e8] sm:$0xff]
    %v116 = vld [vmem:[%s6 + $0x1f0] sm:$0xff]
    %v117 = vld [vmem:[%s6 + $0x1f8] sm:$0xff]
    %v118 = vld [vmem:[%s7] sm:$0x1]
    %v120 = vlaneseq
    %v121 = vshrl.u32 %v120, 7
    %v122 = vsub.s32 0, %v121
    %v123 = vrot.slane %v118, %v122
    %v126 = vcombine.high %v53, %v53
    %v128 = vunpack.c.l.s4 1983009808
    %v129 = vunpack.c.0.s8 %v128
    %v130 = vlaneseq
    %v131 = vshrl.u32 %v130, 7
    %v132 = vsub.s32 %v129, %v131
    %v133 = vrot.slane %v53, %v132
    %v135 = vunpack.c.l.s4 1983009808
    %v136 = vunpack.c.0.s8 %v135
    %v137 = vlaneseq
    %v138 = vshrl.u32 %v137, 7
    %v139 = vsub.s32 %v136, %v138
    %v140 = vrot.slane %v126, %v139
    %v141 = vcombine.high %v133, %v133
    %v142 = vcombine.high %v140, %v140
    %147 = vmatprep.subr.mxu0 0.0
    %148 = vmatpush1.msra.mxu0 %v54
    %149 = vmatprep.subr.mxu0 0.0
    %150 = vmatpush1.msra.mxu0 %v55
    %151 = vmatprep.subr.mxu0 0.0
    %152 = vmatpush1.msra.mxu0 %v56
    %153 = vmatprep.subr.mxu0 0.0
    %154 = vmatpush1.msra.mxu0 %v57
    %155 = vmatprep.subr.mxu0 0.0
    %156 = vmatpush1.msra.mxu0 %v58
    %157 = vmatprep.subr.mxu0 0.0
    %158 = vmatpush1.msra.mxu0 %v59
    %159 = vmatprep.subr.mxu0 0.0
    %160 = vmatpush1.msra.mxu0 %v60
    %161 = vmatprep.subr.mxu0 0.0
    %162 = vmatpush1.msra.mxu0 %v61
    %163 = vmatprep.subr.mxu0 0.0
    %164 = vmatpush1.msra.mxu0 %v62
    %165 = vmatprep.subr.mxu0 0.0
    %166 = vmatpush1.msra.mxu0 %v63
    %167 = vmatprep.subr.mxu0 0.0
    %168 = vmatpush1.msra.mxu0 %v64
    %169 = vmatprep.subr.mxu0 0.0
    %170 = vmatpush1.msra.mxu0 %v65
    %171 = vmatprep.subr.mxu0 0.0
    %172 = vmatpush1.msra.mxu0 %v66
    %173 = vmatprep.subr.mxu0 0.0
    %174 = vmatpush1.msra.mxu0 %v67
    %175 = vmatprep.subr.mxu0 0.0
    %176 = vmatpush1.msra.mxu0 %v68
    %177 = vmatprep.subr.mxu0 0.0
    %178 = vmatpush1.msra.mxu0 %v69
    %179 = vmatprep.subr.mxu0 0.0
    %180 = vmatpush1.msra.mxu0 %v70
    %181 = vmatprep.subr.mxu0 0.0
    %182 = vmatpush1.msra.mxu0 %v71
    %183 = vmatprep.subr.mxu0 0.0
    %184 = vmatpush1.msra.mxu0 %v72
    %185 = vmatprep.subr.mxu0 0.0
    %186 = vmatpush1.msra.mxu0 %v73
    %187 = vmatprep.subr.mxu0 0.0
    %188 = vmatpush1.msra.mxu0 %v74
    %189 = vmatprep.subr.mxu0 0.0
    %190 = vmatpush1.msra.mxu0 %v75
    %191 = vmatprep.subr.mxu0 0.0
    %192 = vmatpush1.msra.mxu0 %v76
    %193 = vmatprep.subr.mxu0 0.0
    %194 = vmatpush1.msra.mxu0 %v77
    %195 = vmatprep.subr.mxu0 0.0
    %196 = vmatpush1.msra.mxu0 %v78
    %197 = vmatprep.subr.mxu0 0.0
    %198 = vmatpush1.msra.mxu0 %v79
    %199 = vmatprep.subr.mxu0 0.0
    %200 = vmatpush1.msra.mxu0 %v80
    %201 = vmatprep.subr.mxu0 0.0
    %202 = vmatpush1.msra.mxu0 %v81
    %203 = vmatprep.subr.mxu0 0.0
    %204 = vmatpush1.msra.mxu0 %v82
    %205 = vmatprep.subr.mxu0 0.0
    %206 = vmatpush1.msra.mxu0 %v83
    %207 = vmatprep.subr.mxu0 0.0
    %208 = vmatpush1.msra.mxu0 %v84
    %209 = vmatprep.subr.mxu0 0.0
    %210 = vmatpush1.msra.mxu0 %v85
    %211 = vmatprep.mubr.f32.mxu0 %v141
    %212 = vmatmul.mubr.f32.gmra.mrb[0].mxu0 %v133
    %v213 = vpop.f32.mrb[0].mxu0
    %v214 = vadd.f32 %v123, %v213
    %v215 = vpop.f32.mrb[0].mxu0
    %216 = vdwg.mxu0
    %217 = vmatprep.subr.mxu0 0.0
    %218 = vmatpush1.msra.mxu0 %v86
    %219 = vmatprep.subr.mxu0 0.0
    %220 = vmatpush1.msra.mxu0 %v87
    %221 = vmatprep.subr.mxu0 0.0
    %222 = vmatpush1.msra.mxu0 %v88
    %223 = vmatprep.subr.mxu0 0.0
    %224 = vmatpush1.msra.mxu0 %v89
    %225 = vmatprep.subr.mxu0 0.0
    %226 = vmatpush1.msra.mxu0 %v90
    %227 = vmatprep.subr.mxu0 0.0
    %228 = vmatpush1.msra.mxu0 %v91
    %229 = vmatprep.subr.mxu0 0.0
    %230 = vmatpush1.msra.mxu0 %v92
    %231 = vmatprep.subr.mxu0 0.0
    %232 = vmatpush1.msra.mxu0 %v93
    %233 = vmatprep.subr.mxu0 0.0
    %234 = vmatpush1.msra.mxu0 %v94
    %235 = vmatprep.subr.mxu0 0.0
    %236 = vmatpush1.msra.mxu0 %v95
    %237 = vmatprep.subr.mxu0 0.0
    %238 = vmatpush1.msra.mxu0 %v96
    %239 = vmatprep.subr.mxu0 0.0
    %240 = vmatpush1.msra.mxu0 %v97
    %241 = vmatprep.subr.mxu0 0.0
    %242 = vmatpush1.msra.mxu0 %v98
    %243 = vmatprep.subr.mxu0 0.0
    %244 = vmatpush1.msra.mxu0 %v99
    %245 = vmatprep.subr.mxu0 0.0
    %246 = vmatpush1.msra.mxu0 %v100
    %247 = vmatprep.subr.mxu0 0.0
    %248 = vmatpush1.msra.mxu0 %v101
    %249 = vmatprep.subr.mxu0 0.0
    %250 = vmatpush1.msra.mxu0 %v102
    %251 = vmatprep.subr.mxu0 0.0
    %252 = vmatpush1.msra.mxu0 %v103
    %253 = vmatprep.subr.mxu0 0.0
    %254 = vmatpush1.msra.mxu0 %v104
    %255 = vmatprep.subr.mxu0 0.0
    %256 = vmatpush1.msra.mxu0 %v105
    %257 = vmatprep.subr.mxu0 0.0
    %258 = vmatpush1.msra.mxu0 %v106
    %259 = vmatprep.subr.mxu0 0.0
    %260 = vmatpush1.msra.mxu0 %v107
    %261 = vmatprep.subr.mxu0 0.0
    %262 = vmatpush1.msra.mxu0 %v108
    %263 = vmatprep.subr.mxu0 0.0
    %264 = vmatpush1.msra.mxu0 %v109
    %265 = vmatprep.subr.mxu0 0.0
    %266 = vmatpush1.msra.mxu0 %v110
    %267 = vmatprep.subr.mxu0 0.0
    %268 = vmatpush1.msra.mxu0 %v111
    %269 = vmatprep.subr.mxu0 0.0
    %270 = vmatpush1.msra.mxu0 %v112
    %271 = vmatprep.subr.mxu0 0.0
    %272 = vmatpush1.msra.mxu0 %v113
    %273 = vmatprep.subr.mxu0 0.0
    %274 = vmatpush1.msra.mxu0 %v114
    %275 = vmatprep.subr.mxu0 0.0
    %276 = vmatpush1.msra.mxu0 %v115
    %277 = vmatprep.subr.mxu0 0.0
    %278 = vmatpush1.msra.mxu0 %v116
    %279 = vmatprep.subr.mxu0 0.0
    %280 = vmatpush1.msra.mxu0 %v117
    %281 = vmatprep.mubr.f32.mxu0 %v142
    %282 = vmatmul.mubr.f32.gmra.mrb[0].mxu0 %v140
    %v283 = vpop.f32.mrb[0].mxu0
    %v284 = vadd.f32 %v214, %v283
    %v285 = vpop.f32.mrb[0].mxu0
    %286 = vdwg.mxu0
    %v287 = vsub.f32 0.0, %v284
    %v288 = vmul.f32 %v287, 1.442695
    %v289 = vpow.pop %v288
    %v290 = vadd.f32 %v289, 1.0
    %v291 = vrcp.pop %v290
    %v292 = vmul.f32 1.0, %v291
    %v293 = vld [vmem:[%s5] sm:$0x3]
    %v296 = vunpack.c.l.s4 1966171168
    %v297 = vunpack.c.0.s8 %v296
    %v298 = vlaneseq
    %v299 = vshrl.u32 %v298, 7
    %v300 = vsub.s32 %v297, %v299
    %v301 = vrot.slane %v293, %v300
    %v302 = vcombine.high %v301, %v301
    %v304 = vunpack.c.l.s4 1966171168
    %v305 = vunpack.c.0.s8 %v304
    %v306 = vlaneseq
    %v307 = vshrl.u32 %v306, 7
    %v308 = vsub.s32 %v305, %v307
    %v309 = vrot.slane %v301, %v308
    %v311 = vunpack.c.l.s4 1966171168
    %v312 = vunpack.c.0.s8 %v311
    %v313 = vlaneseq
    %v314 = vshrl.u32 %v313, 7
    %v315 = vsub.s32 %v312, %v314
    %v316 = vrot.slane %v302, %v315
    %v319 = vrsqrt.pop %v309
    %v320 = vmul.f32 %v309, %v319
    %vm321 = vcmp.eq.f32.partialorder %v309, inf
    %v322 = vsel %vm321, %v309, %v320
    %vm323 = vcmp.eq.f32.partialorder %v309, 0.0
    %v324 = vand.u32 %v309, 2147483648
    %v325 = vsel %vm323, %v324, %v322
    %v326 = vrsqrt.pop %v316
    %v327 = vmul.f32 %v316, %v326
    %vm328 = vcmp.eq.f32.partialorder %v316, inf
    %v329 = vsel %vm328, %v316, %v327
    %vm330 = vcmp.eq.f32.partialorder %v316, 0.0
    %v331 = vand.u32 %v316, 2147483648
    %v332 = vsel %vm330, %v331, %v329
    %v333 = vsub.f32 1.0, %v309
    %v334 = vsub.f32 1.0, %v316
    %v335 = vrsqrt.pop %v333
    %v336 = vmul.f32 %v333, %v335
    %vm337 = vcmp.eq.f32.partialorder %v333, inf
    %v338 = vsel %vm337, %v333, %v336
    %vm339 = vcmp.eq.f32.partialorder %v333, 0.0
    %v340 = vand.u32 %v333, 2147483648
    %v341 = vsel %vm339, %v340, %v338
    %v342 = vrsqrt.pop %v334
    %v343 = vmul.f32 %v334, %v342
    %vm344 = vcmp.eq.f32.partialorder %v334, inf
    %v345 = vsel %vm344, %v334, %v343
    %vm346 = vcmp.eq.f32.partialorder %v334, 0.0
    %v347 = vand.u32 %v334, 2147483648
    %v348 = vsel %vm346, %v347, %v345
    %v351 = vunpack.c.l.s4 1966171168
    %v352 = vunpack.c.0.s8 %v351
    %v353 = vlaneseq
    %v354 = vshrl.u32 %v353, 7
    %v355 = vsub.s32 %v352, %v354
    %v356 = vrot.slane %v292, %v355
    %v357 = vcombine.high %v356, %v356
    %v359 = vunpack.c.l.s4 1966171168
    %v360 = vunpack.c.0.s8 %v359
    %v361 = vlaneseq
    %v362 = vshrl.u32 %v361, 7
    %v363 = vsub.s32 %v360, %v362
    %v364 = vrot.slane %v356, %v363
    %v366 = vunpack.c.l.s4 1966171168
    %v367 = vunpack.c.0.s8 %v366
    %v368 = vlaneseq
    %v369 = vshrl.u32 %v368, 7
    %v370 = vsub.s32 %v367, %v369
    %v371 = vrot.slane %v357, %v370
    %v374 = vlaneseq
    %v375 = vshrl.u32 %v374, 7
    %v376 = vsub.s32 0, %v375
    %v377 = vrot.slane %v325, %v376
    %v378 = vlaneseq
    %v379 = vshrl.u32 %v378, 7
    %v380 = vsub.s32 0, %v379
    %v381 = vrot.slane %v332, %v380
    %382 = vset.pattern.permute.xlu0 0
    %383 = vperm.xlu0 %382, %v377
    %v384 = vpop.permute.xlu0 %383
    %386 = vset.pattern.permute.xlu0 0
    %387 = vperm.xlu0 %386, %v381
    %v388 = vpop.permute.xlu0 %387
    %v390 = vmul.f32 %v384, %v45
    %v391 = vmul.f32 %v384, %v46
    %v392 = vmul.f32 %v388, %v47
    %v393 = vmul.f32 %v388, %v48
    %v394 = vld [vmem:[%s2] sm:$0xff]
    %v395 = vld [vmem:[%s2 + $0x8] sm:$0xff]
    %v396 = vld [vmem:[%s2 + $0x10] sm:$0xff]
    %v397 = vld [vmem:[%s2 + $0x18] sm:$0xff]
    %v398 = vlaneseq
    %v399 = vshrl.u32 %v398, 7
    %v400 = vsub.s32 0, %v399
    %v401 = vrot.slane %v364, %v400
    %v402 = vlaneseq
    %v403 = vshrl.u32 %v402, 7
    %v404 = vsub.s32 0, %v403
    %v405 = vrot.slane %v371, %v404
    %v408 = vmul.f32 %v394, %v401
    %v409 = vmul.f32 %v395, %v401
    %v410 = vmul.f32 %v396, %v405
    %v411 = vmul.f32 %v397, %v405
    %v414 = vlaneseq
    %v415 = vshrl.u32 %v414, 7
    %v416 = vsub.s32 0, %v415
    %v417 = vrot.slane %v341, %v416
    %v418 = vlaneseq
    %v419 = vshrl.u32 %v418, 7
    %v420 = vsub.s32 0, %v419
    %v421 = vrot.slane %v348, %v420
    %422 = vset.pattern.permute.xlu0 0
    %423 = vperm.xlu0 %422, %v417
    %v424 = vpop.permute.xlu0 %423
    %426 = vset.pattern.permute.xlu0 0
    %427 = vperm.xlu0 %426, %v421
    %v428 = vpop.permute.xlu0 %427
    %v430 = vmul.f32 %v424, %v408
    %v431 = vmul.f32 %v424, %v409
    %v432 = vmul.f32 %v428, %v410
    %v433 = vmul.f32 %v428, %v411
    %v434 = vadd.f32 %v390, %v430
    %v435 = vadd.f32 %v391, %v431
    %v436 = vadd.f32 %v392, %v432
    %v437 = vadd.f32 %v393, %v433
    %v438 = vmul.f32 %v384, %v49
    %v439 = vmul.f32 %v384, %v50
    %v440 = vmul.f32 %v388, %v51
    %v441 = vmul.f32 %v388, %v52
    %v442 = vld [vmem:[%s3] sm:$0xff]
    %v443 = vld [vmem:[%s3 + $0x8] sm:$0xff]
    %v444 = vld [vmem:[%s3 + $0x10] sm:$0xff]
    %v445 = vld [vmem:[%s3 + $0x18] sm:$0xff]
    %v446 = vmul.f32 %v442, %v401
    %v447 = vmul.f32 %v443, %v401
    %v448 = vmul.f32 %v444, %v405
    %v449 = vmul.f32 %v445, %v405
    %v450 = vmul.f32 %v424, %v446
    %v451 = vmul.f32 %v424, %v447
    %v452 = vmul.f32 %v428, %v448
    %v453 = vmul.f32 %v428, %v449
    %v454 = vadd.f32 %v438, %v450
    %v455 = vadd.f32 %v439, %v451
    %v456 = vadd.f32 %v440, %v452
    %v457 = vadd.f32 %v441, %v453
    %v458 = vld [vmem:[%s8] sm:$0xff]
    %v459 = vld [vmem:[%s8 + $0x8] sm:$0xff]
    %v460 = vld [vmem:[%s8 + $0x10] sm:$0xff]
    %v461 = vld [vmem:[%s8 + $0x18] sm:$0xff]
    %s462 = scalar_lea.vmem %s8, 32
    %v463 = vld [vmem:[%s462] sm:$0xff]
    %v464 = vld [vmem:[%s462 + $0x8] sm:$0xff]
    %v465 = vld [vmem:[%s462 + $0x10] sm:$0xff]
    %v466 = vld [vmem:[%s462 + $0x18] sm:$0xff]
    %vm467 = vcmask 261120
    %v469 = vsel %vm467, %v49, 0
    %v472 = vsel %vm467, %v50, 0
    %v475 = vsel %vm467, %v51, 0
    %v478 = vsel %vm467, %v52, 0
    %480 = vmatprep.subr.mxu0 0.0
    %481 = vmatpush1.msra.mxu0 %v463
    %482 = vmatprep.subr.mxu0 0.0
    %483 = vmatpush1.msra.mxu0 %v464
    %484 = vmatprep.subr.mxu0 0.0
    %485 = vmatpush1.msra.mxu0 %v465
    %486 = vmatprep.subr.mxu0 0.0
    %487 = vmatpush1.msra.mxu0 %v466
    %488 = vmatprep.subr.mxu0 0.0
    %489 = vmatpush1.msra.mxu0 0.0
    %490 = vmatprep.subr.mxu0 0.0
    %491 = vmatpush1.msra.mxu0 0.0
    %492 = vmatprep.subr.mxu0 0.0
    %493 = vmatpush1.msra.mxu0 0.0
    %494 = vmatprep.subr.mxu0 0.0
    %495 = vmatpush1.msra.mxu0 0.0
    %496 = vmatprep.subr.mxu0 0.0
    %497 = vmatpush1.msra.mxu0 0.0
    %498 = vmatprep.subr.mxu0 0.0
    %499 = vmatpush1.msra.mxu0 0.0
    %500 = vmatprep.subr.mxu0 0.0
    %501 = vmatpush1.msra.mxu0 0.0
    %502 = vmatprep.subr.mxu0 0.0
    %503 = vmatpush1.msra.mxu0 0.0
    %504 = vmatprep.subr.mxu0 0.0
    %505 = vmatpush1.msra.mxu0 0.0
    %506 = vmatprep.subr.mxu0 0.0
    %507 = vmatpush1.msra.mxu0 0.0
    %508 = vmatprep.subr.mxu0 0.0
    %509 = vmatpush1.msra.mxu0 0.0
    %510 = vmatprep.subr.mxu0 0.0
    %511 = vmatpush1.msra.mxu0 0.0
    %512 = vmatprep.subr.mxu0 0.0
    %513 = vmatpush1.msra.mxu0 0.0
    %514 = vmatprep.subr.mxu0 0.0
    %515 = vmatpush1.msra.mxu0 0.0
    %516 = vmatprep.subr.mxu0 0.0
    %517 = vmatpush1.msra.mxu0 0.0
    %518 = vmatprep.subr.mxu0 0.0
    %519 = vmatpush1.msra.mxu0 0.0
    %520 = vmatprep.subr.mxu0 0.0
    %521 = vmatpush1.msra.mxu0 0.0
    %522 = vmatprep.subr.mxu0 0.0
    %523 = vmatpush1.msra.mxu0 0.0
    %524 = vmatprep.subr.mxu0 0.0
    %525 = vmatpush1.msra.mxu0 0.0
    %526 = vmatprep.subr.mxu0 0.0
    %527 = vmatpush1.msra.mxu0 0.0
    %528 = vmatprep.subr.mxu0 0.0
    %529 = vmatpush1.msra.mxu0 0.0
    %530 = vmatprep.subr.mxu0 0.0
    %531 = vmatpush1.msra.mxu0 0.0
    %532 = vmatprep.subr.mxu0 0.0
    %533 = vmatpush1.msra.mxu0 0.0
    %534 = vmatprep.subr.mxu0 0.0
    %535 = vmatpush1.msra.mxu0 0.0
    %536 = vmatprep.subr.mxu0 0.0
    %537 = vmatpush1.msra.mxu0 0.0
    %538 = vmatprep.subr.mxu0 0.0
    %539 = vmatpush1.msra.mxu0 0.0
    %540 = vmatprep.subr.mxu0 0.0
    %541 = vmatpush1.msra.mxu0 0.0
    %542 = vmatprep.subr.mxu0 0.0
    %543 = vmatpush1.msra.mxu0 0.0
    %544 = vmatprep.mubr.f32.mxu0 0.0
    %545 = vmatmul.mubr.f32.gmra.mrb[0].mxu0 %v469
    %v546 = vpop.f32.mrb[0].mxu0
    %v547 = vadd.f32 0.0, %v546
    %v548 = vpop.f32.mrb[0].mxu0
    %549 = vmatprep.mubr.f32.mxu0 0.0
    %550 = vmatmul.mubr.f32.gmra.mrb[0].mxu0 %v472
    %v551 = vpop.f32.mrb[0].mxu0
    %v552 = vadd.f32 0.0, %v551
    %v553 = vpop.f32.mrb[0].mxu0
    %554 = vmatprep.mubr.f32.mxu0 0.0
    %555 = vmatmul.mubr.f32.gmra.mrb[0].mxu0 %v475
    %v556 = vpop.f32.mrb[0].mxu0
    %v557 = vadd.f32 0.0, %v556
    %v558 = vpop.f32.mrb[0].mxu0
    %559 = vmatprep.mubr.f32.mxu0 0.0
    %560 = vmatmul.mubr.f32.gmra.mrb[0].mxu0 %v478
    %v561 = vpop.f32.mrb[0].mxu0
    %v562 = vadd.f32 0.0, %v561
    %v563 = vpop.f32.mrb[0].mxu0
    %564 = vdwg.mxu0
    %v566 = vsel %vm467, %v434, 0
    %v569 = vsel %vm467, %v435, 0
    %v572 = vsel %vm467, %v436, 0
    %v575 = vsel %vm467, %v437, 0
    %577 = vmatprep.subr.mxu0 0.0
    %578 = vmatpush1.msra.mxu0 %v458
    %579 = vmatprep.subr.mxu0 0.0
    %580 = vmatpush1.msra.mxu0 %v459
    %581 = vmatprep.subr.mxu0 0.0
    %582 = vmatpush1.msra.mxu0 %v460
    %583 = vmatprep.subr.mxu0 0.0
    %584 = vmatpush1.msra.mxu0 %v461
    %585 = vmatprep.subr.mxu0 0.0
    %586 = vmatpush1.msra.mxu0 0.0
    %587 = vmatprep.subr.mxu0 0.0
    %588 = vmatpush1.msra.mxu0 0.0
    %589 = vmatprep.subr.mxu0 0.0
    %590 = vmatpush1.msra.mxu0 0.0
    %591 = vmatprep.subr.mxu0 0.0
    %592 = vmatpush1.msra.mxu0 0.0
    %593 = vmatprep.subr.mxu0 0.0
    %594 = vmatpush1.msra.mxu0 0.0
    %595 = vmatprep.subr.mxu0 0.0
    %596 = vmatpush1.msra.mxu0 0.0
    %597 = vmatprep.subr.mxu0 0.0
    %598 = vmatpush1.msra.mxu0 0.0
    %599 = vmatprep.subr.mxu0 0.0
    %600 = vmatpush1.msra.mxu0 0.0
    %601 = vmatprep.subr.mxu0 0.0
    %602 = vmatpush1.msra.mxu0 0.0
    %603 = vmatprep.subr.mxu0 0.0
    %604 = vmatpush1.msra.mxu0 0.0
    %605 = vmatprep.subr.mxu0 0.0
    %606 = vmatpush1.msra.mxu0 0.0
    %607 = vmatprep.subr.mxu0 0.0
    %608 = vmatpush1.msra.mxu0 0.0
    %609 = vmatprep.subr.mxu0 0.0
    %610 = vmatpush1.msra.mxu0 0.0
    %611 = vmatprep.subr.mxu0 0.0
    %612 = vmatpush1.msra.mxu0 0.0
    %613 = vmatprep.subr.mxu0 0.0
    %614 = vmatpush1.msra.mxu0 0.0
    %615 = vmatprep.subr.mxu0 0.0
    %616 = vmatpush1.msra.mxu0 0.0
    %617 = vmatprep.subr.mxu0 0.0
    %618 = vmatpush1.msra.mxu0 0.0
    %619 = vmatprep.subr.mxu0 0.0
    %620 = vmatpush1.msra.mxu0 0.0
    %621 = vmatprep.subr.mxu0 0.0
    %622 = vmatpush1.msra.mxu0 0.0
    %623 = vmatprep.subr.mxu0 0.0
    %624 = vmatpush1.msra.mxu0 0.0
    %625 = vmatprep.subr.mxu0 0.0
    %626 = vmatpush1.msra.mxu0 0.0
    %627 = vmatprep.subr.mxu0 0.0
    %628 = vmatpush1.msra.mxu0 0.0
    %629 = vmatprep.subr.mxu0 0.0
    %630 = vmatpush1.msra.mxu0 0.0
    %631 = vmatprep.subr.mxu0 0.0
    %632 = vmatpush1.msra.mxu0 0.0
    %633 = vmatprep.subr.mxu0 0.0
    %634 = vmatpush1.msra.mxu0 0.0
    %635 = vmatprep.subr.mxu0 0.0
    %636 = vmatpush1.msra.mxu0 0.0
    %637 = vmatprep.subr.mxu0 0.0
    %638 = vmatpush1.msra.mxu0 0.0
    %639 = vmatprep.subr.mxu0 0.0
    %640 = vmatpush1.msra.mxu0 0.0
    %641 = vmatprep.mubr.f32.mxu0 0.0
    %642 = vmatmul.mubr.f32.gmra.mrb[0].mxu0 %v566
    %v643 = vpop.f32.mrb[0].mxu0
    %v644 = vadd.f32 %v547, %v643
    %v645 = vpop.f32.mrb[0].mxu0
    %646 = vmatprep.mubr.f32.mxu0 0.0
    %647 = vmatmul.mubr.f32.gmra.mrb[0].mxu0 %v569
    %v648 = vpop.f32.mrb[0].mxu0
    %v649 = vadd.f32 %v552, %v648
    %v650 = vpop.f32.mrb[0].mxu0
    %651 = vmatprep.mubr.f32.mxu0 0.0
    %652 = vmatmul.mubr.f32.gmra.mrb[0].mxu0 %v572
    %v653 = vpop.f32.mrb[0].mxu0
    %v654 = vadd.f32 %v557, %v653
    %v655 = vpop.f32.mrb[0].mxu0
    %656 = vmatprep.mubr.f32.mxu0 0.0
    %657 = vmatmul.mubr.f32.gmra.mrb[0].mxu0 %v575
    %v658 = vpop.f32.mrb[0].mxu0
    %v659 = vadd.f32 %v562, %v658
    %v660 = vpop.f32.mrb[0].mxu0
    %661 = vdwg.mxu0
    %s662 = scalar_lea.vmem %s8, 64
    %v663 = vld [vmem:[%s662] sm:$0xff]
    %v664 = vld [vmem:[%s662 + $0x8] sm:$0xff]
    %v665 = vld [vmem:[%s662 + $0x10] sm:$0xff]
    %v666 = vld [vmem:[%s662 + $0x18] sm:$0xff]
    %v668 = vsel %vm467, %v454, 0
    %v671 = vsel %vm467, %v455, 0
    %v674 = vsel %vm467, %v456, 0
    %v677 = vsel %vm467, %v457, 0
    %679 = vmatprep.subr.mxu0 0.0
    %680 = vmatpush1.msra.mxu0 %v663
    %681 = vmatprep.subr.mxu0 0.0
    %682 = vmatpush1.msra.mxu0 %v664
    %683 = vmatprep.subr.mxu0 0.0
    %684 = vmatpush1.msra.mxu0 %v665
    %685 = vmatprep.subr.mxu0 0.0
    %686 = vmatpush1.msra.mxu0 %v666
    %687 = vmatprep.subr.mxu0 0.0
    %688 = vmatpush1.msra.mxu0 0.0
    %689 = vmatprep.subr.mxu0 0.0
    %690 = vmatpush1.msra.mxu0 0.0
    %691 = vmatprep.subr.mxu0 0.0
    %692 = vmatpush1.msra.mxu0 0.0
    %693 = vmatprep.subr.mxu0 0.0
    %694 = vmatpush1.msra.mxu0 0.0
    %695 = vmatprep.subr.mxu0 0.0
    %696 = vmatpush1.msra.mxu0 0.0
    %697 = vmatprep.subr.mxu0 0.0
    %698 = vmatpush1.msra.mxu0 0.0
    %699 = vmatprep.subr.mxu0 0.0
    %700 = vmatpush1.msra.mxu0 0.0
    %701 = vmatprep.subr.mxu0 0.0
    %702 = vmatpush1.msra.mxu0 0.0
    %703 = vmatprep.subr.mxu0 0.0
    %704 = vmatpush1.msra.mxu0 0.0
    %705 = vmatprep.subr.mxu0 0.0
    %706 = vmatpush1.msra.mxu0 0.0
    %707 = vmatprep.subr.mxu0 0.0
    %708 = vmatpush1.msra.mxu0 0.0
    %709 = vmatprep.subr.mxu0 0.0
    %710 = vmatpush1.msra.mxu0 0.0
    %711 = vmatprep.subr.mxu0 0.0
    %712 = vmatpush1.msra.mxu0 0.0
    %713 = vmatprep.subr.mxu0 0.0
    %714 = vmatpush1.msra.mxu0 0.0
    %715 = vmatprep.subr.mxu0 0.0
    %716 = vmatpush1.msra.mxu0 0.0
    %717 = vmatprep.subr.mxu0 0.0
    %718 = vmatpush1.msra.mxu0 0.0
    %719 = vmatprep.subr.mxu0 0.0
    %720 = vmatpush1.msra.mxu0 0.0
    %721 = vmatprep.subr.mxu0 0.0
    %722 = vmatpush1.msra.mxu0 0.0
    %723 = vmatprep.subr.mxu0 0.0
    %724 = vmatpush1.msra.mxu0 0.0
    %725 = vmatprep.subr.mxu0 0.0
    %726 = vmatpush1.msra.mxu0 0.0
    %727 = vmatprep.subr.mxu0 0.0
    %728 = vmatpush1.msra.mxu0 0.0
    %729 = vmatprep.subr.mxu0 0.0
    %730 = vmatpush1.msra.mxu0 0.0
    %731 = vmatprep.subr.mxu0 0.0
    %732 = vmatpush1.msra.mxu0 0.0
    %733 = vmatprep.subr.mxu0 0.0
    %734 = vmatpush1.msra.mxu0 0.0
    %735 = vmatprep.subr.mxu0 0.0
    %736 = vmatpush1.msra.mxu0 0.0
    %737 = vmatprep.subr.mxu0 0.0
    %738 = vmatpush1.msra.mxu0 0.0
    %739 = vmatprep.subr.mxu0 0.0
    %740 = vmatpush1.msra.mxu0 0.0
    %741 = vmatprep.subr.mxu0 0.0
    %742 = vmatpush1.msra.mxu0 0.0
    %743 = vmatprep.mubr.f32.mxu0 0.0
    %744 = vmatmul.mubr.f32.gmra.mrb[0].mxu0 %v668
    %v745 = vpop.f32.mrb[0].mxu0
    %v746 = vadd.f32 0.0, %v745
    %v747 = vpop.f32.mrb[0].mxu0
    %748 = vmatprep.mubr.f32.mxu0 0.0
    %749 = vmatmul.mubr.f32.gmra.mrb[0].mxu0 %v671
    %v750 = vpop.f32.mrb[0].mxu0
    %v751 = vadd.f32 0.0, %v750
    %v752 = vpop.f32.mrb[0].mxu0
    %753 = vmatprep.mubr.f32.mxu0 0.0
    %754 = vmatmul.mubr.f32.gmra.mrb[0].mxu0 %v674
    %v755 = vpop.f32.mrb[0].mxu0
    %v756 = vadd.f32 0.0, %v755
    %v757 = vpop.f32.mrb[0].mxu0
    %758 = vmatprep.mubr.f32.mxu0 0.0
    %759 = vmatmul.mubr.f32.gmra.mrb[0].mxu0 %v677
    %v760 = vpop.f32.mrb[0].mxu0
    %v761 = vadd.f32 0.0, %v760
    %v762 = vpop.f32.mrb[0].mxu0
    %763 = vdwg.mxu0
    %v764 = vadd.f32 %v644, %v746
    %v765 = vadd.f32 %v649, %v751
    %v766 = vadd.f32 %v654, %v756
    %v767 = vadd.f32 %v659, %v761
    %s768 = scalar_lea.vmem %s8, 96
    %v769 = vld [vmem:[%s768] sm:$0xff]
    %v770 = vld [vmem:[%s768 + $0x8] sm:$0xff]
    %v771 = vld [vmem:[%s768 + $0x10] sm:$0xff]
    %v772 = vld [vmem:[%s768 + $0x18] sm:$0xff]
    %v774 = vsel %vm467, %v45, 0
    %v777 = vsel %vm467, %v46, 0
    %v780 = vsel %vm467, %v47, 0
    %v783 = vsel %vm467, %v48, 0
    %785 = vmatprep.subr.mxu0 0.0
    %786 = vmatpush1.msra.mxu0 %v769
    %787 = vmatprep.subr.mxu0 0.0
    %788 = vmatpush1.msra.mxu0 %v770
    %789 = vmatprep.subr.mxu0 0.0
    %790 = vmatpush1.msra.mxu0 %v771
    %791 = vmatprep.subr.mxu0 0.0
    %792 = vmatpush1.msra.mxu0 %v772
    %793 = vmatprep.subr.mxu0 0.0
    %794 = vmatpush1.msra.mxu0 0.0
    %795 = vmatprep.subr.mxu0 0.0
    %796 = vmatpush1.msra.mxu0 0.0
    %797 = vmatprep.subr.mxu0 0.0
    %798 = vmatpush1.msra.mxu0 0.0
    %799 = vmatprep.subr.mxu0 0.0
    %800 = vmatpush1.msra.mxu0 0.0
    %801 = vmatprep.subr.mxu0 0.0
    %802 = vmatpush1.msra.mxu0 0.0
    %803 = vmatprep.subr.mxu0 0.0
    %804 = vmatpush1.msra.mxu0 0.0
    %805 = vmatprep.subr.mxu0 0.0
    %806 = vmatpush1.msra.mxu0 0.0
    %807 = vmatprep.subr.mxu0 0.0
    %808 = vmatpush1.msra.mxu0 0.0
    %809 = vmatprep.subr.mxu0 0.0
    %810 = vmatpush1.msra.mxu0 0.0
    %811 = vmatprep.subr.mxu0 0.0
    %812 = vmatpush1.msra.mxu0 0.0
    %813 = vmatprep.subr.mxu0 0.0
    %814 = vmatpush1.msra.mxu0 0.0
    %815 = vmatprep.subr.mxu0 0.0
    %816 = vmatpush1.msra.mxu0 0.0
    %817 = vmatprep.subr.mxu0 0.0
    %818 = vmatpush1.msra.mxu0 0.0
    %819 = vmatprep.subr.mxu0 0.0
    %820 = vmatpush1.msra.mxu0 0.0
    %821 = vmatprep.subr.mxu0 0.0
    %822 = vmatpush1.msra.mxu0 0.0
    %823 = vmatprep.subr.mxu0 0.0
    %824 = vmatpush1.msra.mxu0 0.0
    %825 = vmatprep.subr.mxu0 0.0
    %826 = vmatpush1.msra.mxu0 0.0
    %827 = vmatprep.subr.mxu0 0.0
    %828 = vmatpush1.msra.mxu0 0.0
    %829 = vmatprep.subr.mxu0 0.0
    %830 = vmatpush1.msra.mxu0 0.0
    %831 = vmatprep.subr.mxu0 0.0
    %832 = vmatpush1.msra.mxu0 0.0
    %833 = vmatprep.subr.mxu0 0.0
    %834 = vmatpush1.msra.mxu0 0.0
    %835 = vmatprep.subr.mxu0 0.0
    %836 = vmatpush1.msra.mxu0 0.0
    %837 = vmatprep.subr.mxu0 0.0
    %838 = vmatpush1.msra.mxu0 0.0
    %839 = vmatprep.subr.mxu0 0.0
    %840 = vmatpush1.msra.mxu0 0.0
    %841 = vmatprep.subr.mxu0 0.0
    %842 = vmatpush1.msra.mxu0 0.0
    %843 = vmatprep.subr.mxu0 0.0
    %844 = vmatpush1.msra.mxu0 0.0
    %845 = vmatprep.subr.mxu0 0.0
    %846 = vmatpush1.msra.mxu0 0.0
    %847 = vmatprep.subr.mxu0 0.0
    %848 = vmatpush1.msra.mxu0 0.0
    %849 = vmatprep.mubr.f32.mxu0 0.0
    %850 = vmatmul.mubr.f32.gmra.mrb[0].mxu0 %v774
    %v851 = vpop.f32.mrb[0].mxu0
    %v852 = vadd.f32 0.0, %v851
    %v853 = vpop.f32.mrb[0].mxu0
    %854 = vmatprep.mubr.f32.mxu0 0.0
    %855 = vmatmul.mubr.f32.gmra.mrb[0].mxu0 %v777
    %v856 = vpop.f32.mrb[0].mxu0
    %v857 = vadd.f32 0.0, %v856
    %v858 = vpop.f32.mrb[0].mxu0
    %859 = vmatprep.mubr.f32.mxu0 0.0
    %860 = vmatmul.mubr.f32.gmra.mrb[0].mxu0 %v780
    %v861 = vpop.f32.mrb[0].mxu0
    %v862 = vadd.f32 0.0, %v861
    %v863 = vpop.f32.mrb[0].mxu0
    %864 = vmatprep.mubr.f32.mxu0 0.0
    %865 = vmatmul.mubr.f32.gmra.mrb[0].mxu0 %v783
    %v866 = vpop.f32.mrb[0].mxu0
    %v867 = vadd.f32 0.0, %v866
    %v868 = vpop.f32.mrb[0].mxu0
    %869 = vdwg.mxu0
    %v870 = vadd.f32 %v764, %v852
    %v871 = vadd.f32 %v765, %v857
    %v872 = vadd.f32 %v766, %v862
    %v873 = vadd.f32 %v767, %v867
    %vm878 = vcmask 1040384
    %v879 = vrot.slane %v870, 7
    %v880 = vrot.slane %v871, 7
    %v881 = vsel %vm878, %v879, %v880
    %v882 = vrot.slane %v872, 7
    %v883 = vrot.slane %v873, 7
    %v884 = vsel %vm878, %v882, %v883
    %v889 = vsel %vm878, 0.0, %v879
    %v890 = vsel %vm878, 0.0, %v882
    %s891 = scalar_lea.vmem %s8, 128
    %v892 = vld [vmem:[%s891] sm:$0xff]
    %v893 = vld [vmem:[%s891 + $0x8] sm:$0xff]
    %v894 = vld [vmem:[%s891 + $0x10] sm:$0xff]
    %v895 = vld [vmem:[%s891 + $0x18] sm:$0xff]
    %s896 = scalar_lea.vmem %s8, 160
    %v897 = vld [vmem:[%s896] sm:$0xff]
    %v898 = vld [vmem:[%s896 + $0x8] sm:$0xff]
    %v899 = vld [vmem:[%s896 + $0x10] sm:$0xff]
    %v900 = vld [vmem:[%s896 + $0x18] sm:$0xff]
    %901 = vmatprep.subr.mxu0 0.0
    %902 = vmatpush1.msra.mxu0 %v897
    %903 = vmatprep.subr.mxu0 0.0
    %904 = vmatpush1.msra.mxu0 %v898
    %905 = vmatprep.subr.mxu0 0.0
    %906 = vmatpush1.msra.mxu0 %v899
    %907 = vmatprep.subr.mxu0 0.0
    %908 = vmatpush1.msra.mxu0 %v900
    %909 = vmatprep.subr.mxu0 0.0
    %910 = vmatpush1.msra.mxu0 0.0
    %911 = vmatprep.subr.mxu0 0.0
    %912 = vmatpush1.msra.mxu0 0.0
    %913 = vmatprep.subr.mxu0 0.0
    %914 = vmatpush1.msra.mxu0 0.0
    %915 = vmatprep.subr.mxu0 0.0
    %916 = vmatpush1.msra.mxu0 0.0
    %917 = vmatprep.subr.mxu0 0.0
    %918 = vmatpush1.msra.mxu0 0.0
    %919 = vmatprep.subr.mxu0 0.0
    %920 = vmatpush1.msra.mxu0 0.0
    %921 = vmatprep.subr.mxu0 0.0
    %922 = vmatpush1.msra.mxu0 0.0
    %923 = vmatprep.subr.mxu0 0.0
    %924 = vmatpush1.msra.mxu0 0.0
    %925 = vmatprep.subr.mxu0 0.0
    %926 = vmatpush1.msra.mxu0 0.0
    %927 = vmatprep.subr.mxu0 0.0
    %928 = vmatpush1.msra.mxu0 0.0
    %929 = vmatprep.subr.mxu0 0.0
    %930 = vmatpush1.msra.mxu0 0.0
    %931 = vmatprep.subr.mxu0 0.0
    %932 = vmatpush1.msra.mxu0 0.0
    %933 = vmatprep.subr.mxu0 0.0
    %934 = vmatpush1.msra.mxu0 0.0
    %935 = vmatprep.subr.mxu0 0.0
    %936 = vmatpush1.msra.mxu0 0.0
    %937 = vmatprep.subr.mxu0 0.0
    %938 = vmatpush1.msra.mxu0 0.0
    %939 = vmatprep.subr.mxu0 0.0
    %940 = vmatpush1.msra.mxu0 0.0
    %941 = vmatprep.subr.mxu0 0.0
    %942 = vmatpush1.msra.mxu0 0.0
    %943 = vmatprep.subr.mxu0 0.0
    %944 = vmatpush1.msra.mxu0 0.0
    %945 = vmatprep.subr.mxu0 0.0
    %946 = vmatpush1.msra.mxu0 0.0
    %947 = vmatprep.subr.mxu0 0.0
    %948 = vmatpush1.msra.mxu0 0.0
    %949 = vmatprep.subr.mxu0 0.0
    %950 = vmatpush1.msra.mxu0 0.0
    %951 = vmatprep.subr.mxu0 0.0
    %952 = vmatpush1.msra.mxu0 0.0
    %953 = vmatprep.subr.mxu0 0.0
    %954 = vmatpush1.msra.mxu0 0.0
    %955 = vmatprep.subr.mxu0 0.0
    %956 = vmatpush1.msra.mxu0 0.0
    %957 = vmatprep.subr.mxu0 0.0
    %958 = vmatpush1.msra.mxu0 0.0
    %959 = vmatprep.subr.mxu0 0.0
    %960 = vmatpush1.msra.mxu0 0.0
    %961 = vmatprep.subr.mxu0 0.0
    %962 = vmatpush1.msra.mxu0 0.0
    %963 = vmatprep.subr.mxu0 0.0
    %964 = vmatpush1.msra.mxu0 0.0
    %965 = vmatprep.mubr.f32.mxu0 0.0
    %966 = vmatmul.mubr.f32.gmra.mrb[0].mxu0 %v469
    %v967 = vpop.f32.mrb[0].mxu0
    %v968 = vadd.f32 0.0, %v967
    %v969 = vpop.f32.mrb[0].mxu0
    %970 = vmatprep.mubr.f32.mxu0 0.0
    %971 = vmatmul.mubr.f32.gmra.mrb[0].mxu0 %v472
    %v972 = vpop.f32.mrb[0].mxu0
    %v973 = vadd.f32 0.0, %v972
    %v974 = vpop.f32.mrb[0].mxu0
    %975 = vmatprep.mubr.f32.mxu0 0.0
    %976 = vmatmul.mubr.f32.gmra.mrb[0].mxu0 %v475
    %v977 = vpop.f32.mrb[0].mxu0
    %v978 = vadd.f32 0.0, %v977
    %v979 = vpop.f32.mrb[0].mxu0
    %980 = vmatprep.mubr.f32.mxu0 0.0
    %981 = vmatmul.mubr.f32.gmra.mrb[0].mxu0 %v478
    %v982 = vpop.f32.mrb[0].mxu0
    %v983 = vadd.f32 0.0, %v982
    %v984 = vpop.f32.mrb[0].mxu0
    %985 = vdwg.mxu0
    %986 = vmatprep.subr.mxu0 0.0
    %987 = vmatpush1.msra.mxu0 %v892
    %988 = vmatprep.subr.mxu0 0.0
    %989 = vmatpush1.msra.mxu0 %v893
    %990 = vmatprep.subr.mxu0 0.0
    %991 = vmatpush1.msra.mxu0 %v894
    %992 = vmatprep.subr.mxu0 0.0
    %993 = vmatpush1.msra.mxu0 %v895
    %994 = vmatprep.subr.mxu0 0.0
    %995 = vmatpush1.msra.mxu0 0.0
    %996 = vmatprep.subr.mxu0 0.0
    %997 = vmatpush1.msra.mxu0 0.0
    %998 = vmatprep.subr.mxu0 0.0
    %999 = vmatpush1.msra.mxu0 0.0
    %1000 = vmatprep.subr.mxu0 0.0
    %1001 = vmatpush1.msra.mxu0 0.0
    %1002 = vmatprep.subr.mxu0 0.0
    %1003 = vmatpush1.msra.mxu0 0.0
    %1004 = vmatprep.subr.mxu0 0.0
    %1005 = vmatpush1.msra.mxu0 0.0
    %1006 = vmatprep.subr.mxu0 0.0
    %1007 = vmatpush1.msra.mxu0 0.0
    %1008 = vmatprep.subr.mxu0 0.0
    %1009 = vmatpush1.msra.mxu0 0.0
    %1010 = vmatprep.subr.mxu0 0.0
    %1011 = vmatpush1.msra.mxu0 0.0
    %1012 = vmatprep.subr.mxu0 0.0
    %1013 = vmatpush1.msra.mxu0 0.0
    %1014 = vmatprep.subr.mxu0 0.0
    %1015 = vmatpush1.msra.mxu0 0.0
    %1016 = vmatprep.subr.mxu0 0.0
    %1017 = vmatpush1.msra.mxu0 0.0
    %1018 = vmatprep.subr.mxu0 0.0
    %1019 = vmatpush1.msra.mxu0 0.0
    %1020 = vmatprep.subr.mxu0 0.0
    %1021 = vmatpush1.msra.mxu0 0.0
    %1022 = vmatprep.subr.mxu0 0.0
    %1023 = vmatpush1.msra.mxu0 0.0
    %1024 = vmatprep.subr.mxu0 0.0
    %1025 = vmatpush1.msra.mxu0 0.0
    %1026 = vmatprep.subr.mxu0 0.0
    %1027 = vmatpush1.msra.mxu0 0.0
    %1028 = vmatprep.subr.mxu0 0.0
    %1029 = vmatpush1.msra.mxu0 0.0
    %1030 = vmatprep.subr.mxu0 0.0
    %1031 = vmatpush1.msra.mxu0 0.0
    %1032 = vmatprep.subr.mxu0 0.0
    %1033 = vmatpush1.msra.mxu0 0.0
    %1034 = vmatprep.subr.mxu0 0.0
    %1035 = vmatpush1.msra.mxu0 0.0
    %1036 = vmatprep.subr.mxu0 0.0
    %1037 = vmatpush1.msra.mxu0 0.0
    %1038 = vmatprep.subr.mxu0 0.0
    %1039 = vmatpush1.msra.mxu0 0.0
    %1040 = vmatprep.subr.mxu0 0.0
    %1041 = vmatpush1.msra.mxu0 0.0
    %1042 = vmatprep.subr.mxu0 0.0
    %1043 = vmatpush1.msra.mxu0 0.0
    %1044 = vmatprep.subr.mxu0 0.0
    %1045 = vmatpush1.msra.mxu0 0.0
    %1046 = vmatprep.subr.mxu0 0.0
    %1047 = vmatpush1.msra.mxu0 0.0
    %1048 = vmatprep.subr.mxu0 0.0
    %1049 = vmatpush1.msra.mxu0 0.0
    %1050 = vmatprep.mubr.f32.mxu0 0.0
    %1051 = vmatmul.mubr.f32.gmra.mrb[0].mxu0 %v566
    %v1052 = vpop.f32.mrb[0].mxu0
    %v1053 = vadd.f32 %v968, %v1052
    %v1054 = vpop.f32.mrb[0].mxu0
    %1055 = vmatprep.mubr.f32.mxu0 0.0
    %1056 = vmatmul.mubr.f32.gmra.mrb[0].mxu0 %v569
    %v1057 = vpop.f32.mrb[0].mxu0
    %v1058 = vadd.f32 %v973, %v1057
    %v1059 = vpop.f32.mrb[0].mxu0
    %1060 = vmatprep.mubr.f32.mxu0 0.0
    %1061 = vmatmul.mubr.f32.gmra.mrb[0].mxu0 %v572
    %v1062 = vpop.f32.mrb[0].mxu0
    %v1063 = vadd.f32 %v978, %v1062
    %v1064 = vpop.f32.mrb[0].mxu0
    %1065 = vmatprep.mubr.f32.mxu0 0.0
    %1066 = vmatmul.mubr.f32.gmra.mrb[0].mxu0 %v575
    %v1067 = vpop.f32.mrb[0].mxu0
    %v1068 = vadd.f32 %v983, %v1067
    %v1069 = vpop.f32.mrb[0].mxu0
    %1070 = vdwg.mxu0
    %s1071 = scalar_lea.vmem %s8, 192
    %v1072 = vld [vmem:[%s1071] sm:$0xff]
    %v1073 = vld [vmem:[%s1071 + $0x8] sm:$0xff]
    %v1074 = vld [vmem:[%s1071 + $0x10] sm:$0xff]
    %v1075 = vld [vmem:[%s1071 + $0x18] sm:$0xff]
    %1076 = vmatprep.subr.mxu0 0.0
    %1077 = vmatpush1.msra.mxu0 %v1072
    %1078 = vmatprep.subr.mxu0 0.0
    %1079 = vmatpush1.msra.mxu0 %v1073
    %1080 = vmatprep.subr.mxu0 0.0
    %1081 = vmatpush1.msra.mxu0 %v1074
    %1082 = vmatprep.subr.mxu0 0.0
    %1083 = vmatpush1.msra.mxu0 %v1075
    %1084 = vmatprep.subr.mxu0 0.0
    %1085 = vmatpush1.msra.mxu0 0.0
    %1086 = vmatprep.subr.mxu0 0.0
    %1087 = vmatpush1.msra.mxu0 0.0
    %1088 = vmatprep.subr.mxu0 0.0
    %1089 = vmatpush1.msra.mxu0 0.0
    %1090 = vmatprep.subr.mxu0 0.0
    %1091 = vmatpush1.msra.mxu0 0.0
    %1092 = vmatprep.subr.mxu0 0.0
    %1093 = vmatpush1.msra.mxu0 0.0
    %1094 = vmatprep.subr.mxu0 0.0
    %1095 = vmatpush1.msra.mxu0 0.0
    %1096 = vmatprep.subr.mxu0 0.0
    %1097 = vmatpush1.msra.mxu0 0.0
    %1098 = vmatprep.subr.mxu0 0.0
    %1099 = vmatpush1.msra.mxu0 0.0
    %1100 = vmatprep.subr.mxu0 0.0
    %1101 = vmatpush1.msra.mxu0 0.0
    %1102 = vmatprep.subr.mxu0 0.0
    %1103 = vmatpush1.msra.mxu0 0.0
    %1104 = vmatprep.subr.mxu0 0.0
    %1105 = vmatpush1.msra.mxu0 0.0
    %1106 = vmatprep.subr.mxu0 0.0
    %1107 = vmatpush1.msra.mxu0 0.0
    %1108 = vmatprep.subr.mxu0 0.0
    %1109 = vmatpush1.msra.mxu0 0.0
    %1110 = vmatprep.subr.mxu0 0.0
    %1111 = vmatpush1.msra.mxu0 0.0
    %1112 = vmatprep.subr.mxu0 0.0
    %1113 = vmatpush1.msra.mxu0 0.0
    %1114 = vmatprep.subr.mxu0 0.0
    %1115 = vmatpush1.msra.mxu0 0.0
    %1116 = vmatprep.subr.mxu0 0.0
    %1117 = vmatpush1.msra.mxu0 0.0
    %1118 = vmatprep.subr.mxu0 0.0
    %1119 = vmatpush1.msra.mxu0 0.0
    %1120 = vmatprep.subr.mxu0 0.0
    %1121 = vmatpush1.msra.mxu0 0.0
    %1122 = vmatprep.subr.mxu0 0.0
    %1123 = vmatpush1.msra.mxu0 0.0
    %1124 = vmatprep.subr.mxu0 0.0
    %1125 = vmatpush1.msra.mxu0 0.0
    %1126 = vmatprep.subr.mxu0 0.0
    %1127 = vmatpush1.msra.mxu0 0.0
    %1128 = vmatprep.subr.mxu0 0.0
    %1129 = vmatpush1.msra.mxu0 0.0
    %1130 = vmatprep.subr.mxu0 0.0
    %1131 = vmatpush1.msra.mxu0 0.0
    %1132 = vmatprep.subr.mxu0 0.0
    %1133 = vmatpush1.msra.mxu0 0.0
    %1134 = vmatprep.subr.mxu0 0.0
    %1135 = vmatpush1.msra.mxu0 0.0
    %1136 = vmatprep.subr.mxu0 0.0
    %1137 = vmatpush1.msra.mxu0 0.0
    %1138 = vmatprep.subr.mxu0 0.0
    %1139 = vmatpush1.msra.mxu0 0.0
    %1140 = vmatprep.mubr.f32.mxu0 0.0
    %1141 = vmatmul.mubr.f32.gmra.mrb[0].mxu0 %v668
    %v1142 = vpop.f32.mrb[0].mxu0
    %v1143 = vadd.f32 0.0, %v1142
    %v1144 = vpop.f32.mrb[0].mxu0
    %1145 = vmatprep.mubr.f32.mxu0 0.0
    %1146 = vmatmul.mubr.f32.gmra.mrb[0].mxu0 %v671
    %v1147 = vpop.f32.mrb[0].mxu0
    %v1148 = vadd.f32 0.0, %v1147
    %v1149 = vpop.f32.mrb[0].mxu0
    %1150 = vmatprep.mubr.f32.mxu0 0.0
    %1151 = vmatmul.mubr.f32.gmra.mrb[0].mxu0 %v674
    %v1152 = vpop.f32.mrb[0].mxu0
    %v1153 = vadd.f32 0.0, %v1152
    %v1154 = vpop.f32.mrb[0].mxu0
    %1155 = vmatprep.mubr.f32.mxu0 0.0
    %1156 = vmatmul.mubr.f32.gmra.mrb[0].mxu0 %v677
    %v1157 = vpop.f32.mrb[0].mxu0
    %v1158 = vadd.f32 0.0, %v1157
    %v1159 = vpop.f32.mrb[0].mxu0
    %1160 = vdwg.mxu0
    %v1161 = vadd.f32 %v1053, %v1143
    %v1162 = vadd.f32 %v1058, %v1148
    %v1163 = vadd.f32 %v1063, %v1153
    %v1164 = vadd.f32 %v1068, %v1158
    %s1165 = scalar_lea.vmem %s8, 224
    %v1166 = vld [vmem:[%s1165] sm:$0xff]
    %v1167 = vld [vmem:[%s1165 + $0x8] sm:$0xff]
    %v1168 = vld [vmem:[%s1165 + $0x10] sm:$0xff]
    %v1169 = vld [vmem:[%s1165 + $0x18] sm:$0xff]
    %1170 = vmatprep.subr.mxu0 0.0
    %1171 = vmatpush1.msra.mxu0 %v1166
    %1172 = vmatprep.subr.mxu0 0.0
    %1173 = vmatpush1.msra.mxu0 %v1167
    %1174 = vmatprep.subr.mxu0 0.0
    %1175 = vmatpush1.msra.mxu0 %v1168
    %1176 = vmatprep.subr.mxu0 0.0
    %1177 = vmatpush1.msra.mxu0 %v1169
    %1178 = vmatprep.subr.mxu0 0.0
    %1179 = vmatpush1.msra.mxu0 0.0
    %1180 = vmatprep.subr.mxu0 0.0
    %1181 = vmatpush1.msra.mxu0 0.0
    %1182 = vmatprep.subr.mxu0 0.0
    %1183 = vmatpush1.msra.mxu0 0.0
    %1184 = vmatprep.subr.mxu0 0.0
    %1185 = vmatpush1.msra.mxu0 0.0
    %1186 = vmatprep.subr.mxu0 0.0
    %1187 = vmatpush1.msra.mxu0 0.0
    %1188 = vmatprep.subr.mxu0 0.0
    %1189 = vmatpush1.msra.mxu0 0.0
    %1190 = vmatprep.subr.mxu0 0.0
    %1191 = vmatpush1.msra.mxu0 0.0
    %1192 = vmatprep.subr.mxu0 0.0
    %1193 = vmatpush1.msra.mxu0 0.0
    %1194 = vmatprep.subr.mxu0 0.0
    %1195 = vmatpush1.msra.mxu0 0.0
    %1196 = vmatprep.subr.mxu0 0.0
    %1197 = vmatpush1.msra.mxu0 0.0
    %1198 = vmatprep.subr.mxu0 0.0
    %1199 = vmatpush1.msra.mxu0 0.0
    %1200 = vmatprep.subr.mxu0 0.0
    %1201 = vmatpush1.msra.mxu0 0.0
    %1202 = vmatprep.subr.mxu0 0.0
    %1203 = vmatpush1.msra.mxu0 0.0
    %1204 = vmatprep.subr.mxu0 0.0
    %1205 = vmatpush1.msra.mxu0 0.0
    %1206 = vmatprep.subr.mxu0 0.0
    %1207 = vmatpush1.msra.mxu0 0.0
    %1208 = vmatprep.subr.mxu0 0.0
    %1209 = vmatpush1.msra.mxu0 0.0
    %1210 = vmatprep.subr.mxu0 0.0
    %1211 = vmatpush1.msra.mxu0 0.0
    %1212 = vmatprep.subr.mxu0 0.0
    %1213 = vmatpush1.msra.mxu0 0.0
    %1214 = vmatprep.subr.mxu0 0.0
    %1215 = vmatpush1.msra.mxu0 0.0
    %1216 = vmatprep.subr.mxu0 0.0
    %1217 = vmatpush1.msra.mxu0 0.0
    %1218 = vmatprep.subr.mxu0 0.0
    %1219 = vmatpush1.msra.mxu0 0.0
    %1220 = vmatprep.subr.mxu0 0.0
    %1221 = vmatpush1.msra.mxu0 0.0
    %1222 = vmatprep.subr.mxu0 0.0
    %1223 = vmatpush1.msra.mxu0 0.0
    %1224 = vmatprep.subr.mxu0 0.0
    %1225 = vmatpush1.msra.mxu0 0.0
    %1226 = vmatprep.subr.mxu0 0.0
    %1227 = vmatpush1.msra.mxu0 0.0
    %1228 = vmatprep.subr.mxu0 0.0
    %1229 = vmatpush1.msra.mxu0 0.0
    %1230 = vmatprep.subr.mxu0 0.0
    %1231 = vmatpush1.msra.mxu0 0.0
    %1232 = vmatprep.subr.mxu0 0.0
    %1233 = vmatpush1.msra.mxu0 0.0
    %1234 = vmatprep.mubr.f32.mxu0 0.0
    %1235 = vmatmul.mubr.f32.gmra.mrb[0].mxu0 %v774
    %v1236 = vpop.f32.mrb[0].mxu0
    %v1237 = vadd.f32 0.0, %v1236
    %v1238 = vpop.f32.mrb[0].mxu0
    %1239 = vmatprep.mubr.f32.mxu0 0.0
    %1240 = vmatmul.mubr.f32.gmra.mrb[0].mxu0 %v777
    %v1241 = vpop.f32.mrb[0].mxu0
    %v1242 = vadd.f32 0.0, %v1241
    %v1243 = vpop.f32.mrb[0].mxu0
    %1244 = vmatprep.mubr.f32.mxu0 0.0
    %1245 = vmatmul.mubr.f32.gmra.mrb[0].mxu0 %v780
    %v1246 = vpop.f32.mrb[0].mxu0
    %v1247 = vadd.f32 0.0, %v1246
    %v1248 = vpop.f32.mrb[0].mxu0
    %1249 = vmatprep.mubr.f32.mxu0 0.0
    %1250 = vmatmul.mubr.f32.gmra.mrb[0].mxu0 %v783
    %v1251 = vpop.f32.mrb[0].mxu0
    %v1252 = vadd.f32 0.0, %v1251
    %v1253 = vpop.f32.mrb[0].mxu0
    %1254 = vdwg.mxu0
    %v1255 = vadd.f32 %v1161, %v1237
    %v1256 = vadd.f32 %v1162, %v1242
    %v1257 = vadd.f32 %v1163, %v1247
    %v1258 = vadd.f32 %v1164, %v1252
    %v1259 = vadd.f32 %v889, %v1255
    %v1260 = vadd.f32 %v881, %v1256
    %v1261 = vadd.f32 %v890, %v1257
    %v1262 = vadd.f32 %v884, %v1258
    %s1263 = scalar_lea.vmem %s8, 256
    %v1264 = vld [vmem:[%s1263] sm:$0xff]
    %v1265 = vld [vmem:[%s1263 + $0x8] sm:$0xff]
    %v1266 = vld [vmem:[%s1263 + $0x10] sm:$0xff]
    %v1267 = vld [vmem:[%s1263 + $0x18] sm:$0xff]
    %s1268 = scalar_lea.vmem %s8, 288
    %v1269 = vld [vmem:[%s1268] sm:$0xff]
    %v1270 = vld [vmem:[%s1268 + $0x8] sm:$0xff]
    %v1271 = vld [vmem:[%s1268 + $0x10] sm:$0xff]
    %v1272 = vld [vmem:[%s1268 + $0x18] sm:$0xff]
    %1273 = vmatprep.subr.mxu0 0.0
    %1274 = vmatpush1.msra.mxu0 %v1269
    %1275 = vmatprep.subr.mxu0 0.0
    %1276 = vmatpush1.msra.mxu0 %v1270
    %1277 = vmatprep.subr.mxu0 0.0
    %1278 = vmatpush1.msra.mxu0 %v1271
    %1279 = vmatprep.subr.mxu0 0.0
    %1280 = vmatpush1.msra.mxu0 %v1272
    %1281 = vmatprep.subr.mxu0 0.0
    %1282 = vmatpush1.msra.mxu0 0.0
    %1283 = vmatprep.subr.mxu0 0.0
    %1284 = vmatpush1.msra.mxu0 0.0
    %1285 = vmatprep.subr.mxu0 0.0
    %1286 = vmatpush1.msra.mxu0 0.0
    %1287 = vmatprep.subr.mxu0 0.0
    %1288 = vmatpush1.msra.mxu0 0.0
    %1289 = vmatprep.subr.mxu0 0.0
    %1290 = vmatpush1.msra.mxu0 0.0
    %1291 = vmatprep.subr.mxu0 0.0
    %1292 = vmatpush1.msra.mxu0 0.0
    %1293 = vmatprep.subr.mxu0 0.0
    %1294 = vmatpush1.msra.mxu0 0.0
    %1295 = vmatprep.subr.mxu0 0.0
    %1296 = vmatpush1.msra.mxu0 0.0
    %1297 = vmatprep.subr.mxu0 0.0
    %1298 = vmatpush1.msra.mxu0 0.0
    %1299 = vmatprep.subr.mxu0 0.0
    %1300 = vmatpush1.msra.mxu0 0.0
    %1301 = vmatprep.subr.mxu0 0.0
    %1302 = vmatpush1.msra.mxu0 0.0
    %1303 = vmatprep.subr.mxu0 0.0
    %1304 = vmatpush1.msra.mxu0 0.0
    %1305 = vmatprep.subr.mxu0 0.0
    %1306 = vmatpush1.msra.mxu0 0.0
    %1307 = vmatprep.subr.mxu0 0.0
    %1308 = vmatpush1.msra.mxu0 0.0
    %1309 = vmatprep.subr.mxu0 0.0
    %1310 = vmatpush1.msra.mxu0 0.0
    %1311 = vmatprep.subr.mxu0 0.0
    %1312 = vmatpush1.msra.mxu0 0.0
    %1313 = vmatprep.subr.mxu0 0.0
    %1314 = vmatpush1.msra.mxu0 0.0
    %1315 = vmatprep.subr.mxu0 0.0
    %1316 = vmatpush1.msra.mxu0 0.0
    %1317 = vmatprep.subr.mxu0 0.0
    %1318 = vmatpush1.msra.mxu0 0.0
    %1319 = vmatprep.subr.mxu0 0.0
    %1320 = vmatpush1.msra.mxu0 0.0
    %1321 = vmatprep.subr.mxu0 0.0
    %1322 = vmatpush1.msra.mxu0 0.0
    %1323 = vmatprep.subr.mxu0 0.0
    %1324 = vmatpush1.msra.mxu0 0.0
    %1325 = vmatprep.subr.mxu0 0.0
    %1326 = vmatpush1.msra.mxu0 0.0
    %1327 = vmatprep.subr.mxu0 0.0
    %1328 = vmatpush1.msra.mxu0 0.0
    %1329 = vmatprep.subr.mxu0 0.0
    %1330 = vmatpush1.msra.mxu0 0.0
    %1331 = vmatprep.subr.mxu0 0.0
    %1332 = vmatpush1.msra.mxu0 0.0
    %1333 = vmatprep.subr.mxu0 0.0
    %1334 = vmatpush1.msra.mxu0 0.0
    %1335 = vmatprep.subr.mxu0 0.0
    %1336 = vmatpush1.msra.mxu0 0.0
    %1337 = vmatprep.mubr.f32.mxu0 0.0
    %1338 = vmatmul.mubr.f32.gmra.mrb[0].mxu0 %v469
    %v1339 = vpop.f32.mrb[0].mxu0
    %v1340 = vadd.f32 0.0, %v1339
    %v1341 = vpop.f32.mrb[0].mxu0
    %1342 = vmatprep.mubr.f32.mxu0 0.0
    %1343 = vmatmul.mubr.f32.gmra.mrb[0].mxu0 %v472
    %v1344 = vpop.f32.mrb[0].mxu0
    %v1345 = vadd.f32 0.0, %v1344
    %v1346 = vpop.f32.mrb[0].mxu0
    %1347 = vmatprep.mubr.f32.mxu0 0.0
    %1348 = vmatmul.mubr.f32.gmra.mrb[0].mxu0 %v475
    %v1349 = vpop.f32.mrb[0].mxu0
    %v1350 = vadd.f32 0.0, %v1349
    %v1351 = vpop.f32.mrb[0].mxu0
    %1352 = vmatprep.mubr.f32.mxu0 0.0
    %1353 = vmatmul.mubr.f32.gmra.mrb[0].mxu0 %v478
    %v1354 = vpop.f32.mrb[0].mxu0
    %v1355 = vadd.f32 0.0, %v1354
    %v1356 = vpop.f32.mrb[0].mxu0
    %1357 = vdwg.mxu0
    %1358 = vmatprep.subr.mxu0 0.0
    %1359 = vmatpush1.msra.mxu0 %v1264
    %1360 = vmatprep.subr.mxu0 0.0
    %1361 = vmatpush1.msra.mxu0 %v1265
    %1362 = vmatprep.subr.mxu0 0.0
    %1363 = vmatpush1.msra.mxu0 %v1266
    %1364 = vmatprep.subr.mxu0 0.0
    %1365 = vmatpush1.msra.mxu0 %v1267
    %1366 = vmatprep.subr.mxu0 0.0
    %1367 = vmatpush1.msra.mxu0 0.0
    %1368 = vmatprep.subr.mxu0 0.0
    %1369 = vmatpush1.msra.mxu0 0.0
    %1370 = vmatprep.subr.mxu0 0.0
    %1371 = vmatpush1.msra.mxu0 0.0
    %1372 = vmatprep.subr.mxu0 0.0
    %1373 = vmatpush1.msra.mxu0 0.0
    %1374 = vmatprep.subr.mxu0 0.0
    %1375 = vmatpush1.msra.mxu0 0.0
    %1376 = vmatprep.subr.mxu0 0.0
    %1377 = vmatpush1.msra.mxu0 0.0
    %1378 = vmatprep.subr.mxu0 0.0
    %1379 = vmatpush1.msra.mxu0 0.0
    %1380 = vmatprep.subr.mxu0 0.0
    %1381 = vmatpush1.msra.mxu0 0.0
    %1382 = vmatprep.subr.mxu0 0.0
    %1383 = vmatpush1.msra.mxu0 0.0
    %1384 = vmatprep.subr.mxu0 0.0
    %1385 = vmatpush1.msra.mxu0 0.0
    %1386 = vmatprep.subr.mxu0 0.0
    %1387 = vmatpush1.msra.mxu0 0.0
    %1388 = vmatprep.subr.mxu0 0.0
    %1389 = vmatpush1.msra.mxu0 0.0
    %1390 = vmatprep.subr.mxu0 0.0
    %1391 = vmatpush1.msra.mxu0 0.0
    %1392 = vmatprep.subr.mxu0 0.0
    %1393 = vmatpush1.msra.mxu0 0.0
    %1394 = vmatprep.subr.mxu0 0.0
    %1395 = vmatpush1.msra.mxu0 0.0
    %1396 = vmatprep.subr.mxu0 0.0
    %1397 = vmatpush1.msra.mxu0 0.0
    %1398 = vmatprep.subr.mxu0 0.0
    %1399 = vmatpush1.msra.mxu0 0.0
    %1400 = vmatprep.subr.mxu0 0.0
    %1401 = vmatpush1.msra.mxu0 0.0
    %1402 = vmatprep.subr.mxu0 0.0
    %1403 = vmatpush1.msra.mxu0 0.0
    %1404 = vmatprep.subr.mxu0 0.0
    %1405 = vmatpush1.msra.mxu0 0.0
    %1406 = vmatprep.subr.mxu0 0.0
    %1407 = vmatpush1.msra.mxu0 0.0
    %1408 = vmatprep.subr.mxu0 0.0
    %1409 = vmatpush1.msra.mxu0 0.0
    %1410 = vmatprep.subr.mxu0 0.0
    %1411 = vmatpush1.msra.mxu0 0.0
    %1412 = vmatprep.subr.mxu0 0.0
    %1413 = vmatpush1.msra.mxu0 0.0
    %1414 = vmatprep.subr.mxu0 0.0
    %1415 = vmatpush1.msra.mxu0 0.0
    %1416 = vmatprep.subr.mxu0 0.0
    %1417 = vmatpush1.msra.mxu0 0.0
    %1418 = vmatprep.subr.mxu0 0.0
    %1419 = vmatpush1.msra.mxu0 0.0
    %1420 = vmatprep.subr.mxu0 0.0
    %1421 = vmatpush1.msra.mxu0 0.0
    %1422 = vmatprep.mubr.f32.mxu0 0.0
    %1423 = vmatmul.mubr.f32.gmra.mrb[0].mxu0 %v566
    %v1424 = vpop.f32.mrb[0].mxu0
    %v1425 = vadd.f32 %v1340, %v1424
    %v1426 = vpop.f32.mrb[0].mxu0
    %1427 = vmatprep.mubr.f32.mxu0 0.0
    %1428 = vmatmul.mubr.f32.gmra.mrb[0].mxu0 %v569
    %v1429 = vpop.f32.mrb[0].mxu0
    %v1430 = vadd.f32 %v1345, %v1429
    %v1431 = vpop.f32.mrb[0].mxu0
    %1432 = vmatprep.mubr.f32.mxu0 0.0
    %1433 = vmatmul.mubr.f32.gmra.mrb[0].mxu0 %v572
    %v1434 = vpop.f32.mrb[0].mxu0
    %v1435 = vadd.f32 %v1350, %v1434
    %v1436 = vpop.f32.mrb[0].mxu0
    %1437 = vmatprep.mubr.f32.mxu0 0.0
    %1438 = vmatmul.mubr.f32.gmra.mrb[0].mxu0 %v575
    %v1439 = vpop.f32.mrb[0].mxu0
    %v1440 = vadd.f32 %v1355, %v1439
    %v1441 = vpop.f32.mrb[0].mxu0
    %1442 = vdwg.mxu0
    %s1443 = scalar_lea.vmem %s8, 320
    %v1444 = vld [vmem:[%s1443] sm:$0xff]
    %v1445 = vld [vmem:[%s1443 + $0x8] sm:$0xff]
    %v1446 = vld [vmem:[%s1443 + $0x10] sm:$0xff]
    %v1447 = vld [vmem:[%s1443 + $0x18] sm:$0xff]
    %1448 = vmatprep.subr.mxu0 0.0
    %1449 = vmatpush1.msra.mxu0 %v1444
    %1450 = vmatprep.subr.mxu0 0.0
    %1451 = vmatpush1.msra.mxu0 %v1445
    %1452 = vmatprep.subr.mxu0 0.0
    %1453 = vmatpush1.msra.mxu0 %v1446
    %1454 = vmatprep.subr.mxu0 0.0
    %1455 = vmatpush1.msra.mxu0 %v1447
    %1456 = vmatprep.subr.mxu0 0.0
    %1457 = vmatpush1.msra.mxu0 0.0
    %1458 = vmatprep.subr.mxu0 0.0
    %1459 = vmatpush1.msra.mxu0 0.0
    %1460 = vmatprep.subr.mxu0 0.0
    %1461 = vmatpush1.msra.mxu0 0.0
    %1462 = vmatprep.subr.mxu0 0.0
    %1463 = vmatpush1.msra.mxu0 0.0
    %1464 = vmatprep.subr.mxu0 0.0
    %1465 = vmatpush1.msra.mxu0 0.0
    %1466 = vmatprep.subr.mxu0 0.0
    %1467 = vmatpush1.msra.mxu0 0.0
    %1468 = vmatprep.subr.mxu0 0.0
    %1469 = vmatpush1.msra.mxu0 0.0
    %1470 = vmatprep.subr.mxu0 0.0
    %1471 = vmatpush1.msra.mxu0 0.0
    %1472 = vmatprep.subr.mxu0 0.0
    %1473 = vmatpush1.msra.mxu0 0.0
    %1474 = vmatprep.subr.mxu0 0.0
    %1475 = vmatpush1.msra.mxu0 0.0
    %1476 = vmatprep.subr.mxu0 0.0
    %1477 = vmatpush1.msra.mxu0 0.0
    %1478 = vmatprep.subr.mxu0 0.0
    %1479 = vmatpush1.msra.mxu0 0.0
    %1480 = vmatprep.subr.mxu0 0.0
    %1481 = vmatpush1.msra.mxu0 0.0
    %1482 = vmatprep.subr.mxu0 0.0
    %1483 = vmatpush1.msra.mxu0 0.0
    %1484 = vmatprep.subr.mxu0 0.0
    %1485 = vmatpush1.msra.mxu0 0.0
    %1486 = vmatprep.subr.mxu0 0.0
    %1487 = vmatpush1.msra.mxu0 0.0
    %1488 = vmatprep.subr.mxu0 0.0
    %1489 = vmatpush1.msra.mxu0 0.0
    %1490 = vmatprep.subr.mxu0 0.0
    %1491 = vmatpush1.msra.mxu0 0.0
    %1492 = vmatprep.subr.mxu0 0.0
    %1493 = vmatpush1.msra.mxu0 0.0
    %1494 = vmatprep.subr.mxu0 0.0
    %1495 = vmatpush1.msra.mxu0 0.0
    %1496 = vmatprep.subr.mxu0 0.0
    %1497 = vmatpush1.msra.mxu0 0.0
    %1498 = vmatprep.subr.mxu0 0.0
    %1499 = vmatpush1.msra.mxu0 0.0
    %1500 = vmatprep.subr.mxu0 0.0
    %1501 = vmatpush1.msra.mxu0 0.0
    %1502 = vmatprep.subr.mxu0 0.0
    %1503 = vmatpush1.msra.mxu0 0.0
    %1504 = vmatprep.subr.mxu0 0.0
    %1505 = vmatpush1.msra.mxu0 0.0
    %1506 = vmatprep.subr.mxu0 0.0
    %1507 = vmatpush1.msra.mxu0 0.0
    %1508 = vmatprep.subr.mxu0 0.0
    %1509 = vmatpush1.msra.mxu0 0.0
    %1510 = vmatprep.subr.mxu0 0.0
    %1511 = vmatpush1.msra.mxu0 0.0
    %1512 = vmatprep.mubr.f32.mxu0 0.0
    %1513 = vmatmul.mubr.f32.gmra.mrb[0].mxu0 %v668
    %v1514 = vpop.f32.mrb[0].mxu0
    %v1515 = vadd.f32 0.0, %v1514
    %v1516 = vpop.f32.mrb[0].mxu0
    %1517 = vmatprep.mubr.f32.mxu0 0.0
    %1518 = vmatmul.mubr.f32.gmra.mrb[0].mxu0 %v671
    %v1519 = vpop.f32.mrb[0].mxu0
    %v1520 = vadd.f32 0.0, %v1519
    %v1521 = vpop.f32.mrb[0].mxu0
    %1522 = vmatprep.mubr.f32.mxu0 0.0
    %1523 = vmatmul.mubr.f32.gmra.mrb[0].mxu0 %v674
    %v1524 = vpop.f32.mrb[0].mxu0
    %v1525 = vadd.f32 0.0, %v1524
    %v1526 = vpop.f32.mrb[0].mxu0
    %1527 = vmatprep.mubr.f32.mxu0 0.0
    %1528 = vmatmul.mubr.f32.gmra.mrb[0].mxu0 %v677
    %v1529 = vpop.f32.mrb[0].mxu0
    %v1530 = vadd.f32 0.0, %v1529
    %v1531 = vpop.f32.mrb[0].mxu0
    %1532 = vdwg.mxu0
    %v1533 = vadd.f32 %v1425, %v1515
    %v1534 = vadd.f32 %v1430, %v1520
    %v1535 = vadd.f32 %v1435, %v1525
    %v1536 = vadd.f32 %v1440, %v1530
    %s1537 = scalar_lea.vmem %s8, 352
    %v1538 = vld [vmem:[%s1537] sm:$0xff]
    %v1539 = vld [vmem:[%s1537 + $0x8] sm:$0xff]
    %v1540 = vld [vmem:[%s1537 + $0x10] sm:$0xff]
    %v1541 = vld [vmem:[%s1537 + $0x18] sm:$0xff]
    %1542 = vmatprep.subr.mxu0 0.0
    %1543 = vmatpush1.msra.mxu0 %v1538
    %1544 = vmatprep.subr.mxu0 0.0
    %1545 = vmatpush1.msra.mxu0 %v1539
    %1546 = vmatprep.subr.mxu0 0.0
    %1547 = vmatpush1.msra.mxu0 %v1540
    %1548 = vmatprep.subr.mxu0 0.0
    %1549 = vmatpush1.msra.mxu0 %v1541
    %1550 = vmatprep.subr.mxu0 0.0
    %1551 = vmatpush1.msra.mxu0 0.0
    %1552 = vmatprep.subr.mxu0 0.0
    %1553 = vmatpush1.msra.mxu0 0.0
    %1554 = vmatprep.subr.mxu0 0.0
    %1555 = vmatpush1.msra.mxu0 0.0
    %1556 = vmatprep.subr.mxu0 0.0
    %1557 = vmatpush1.msra.mxu0 0.0
    %1558 = vmatprep.subr.mxu0 0.0
    %1559 = vmatpush1.msra.mxu0 0.0
    %1560 = vmatprep.subr.mxu0 0.0
    %1561 = vmatpush1.msra.mxu0 0.0
    %1562 = vmatprep.subr.mxu0 0.0
    %1563 = vmatpush1.msra.mxu0 0.0
    %1564 = vmatprep.subr.mxu0 0.0
    %1565 = vmatpush1.msra.mxu0 0.0
    %1566 = vmatprep.subr.mxu0 0.0
    %1567 = vmatpush1.msra.mxu0 0.0
    %1568 = vmatprep.subr.mxu0 0.0
    %1569 = vmatpush1.msra.mxu0 0.0
    %1570 = vmatprep.subr.mxu0 0.0
    %1571 = vmatpush1.msra.mxu0 0.0
    %1572 = vmatprep.subr.mxu0 0.0
    %1573 = vmatpush1.msra.mxu0 0.0
    %1574 = vmatprep.subr.mxu0 0.0
    %1575 = vmatpush1.msra.mxu0 0.0
    %1576 = vmatprep.subr.mxu0 0.0
    %1577 = vmatpush1.msra.mxu0 0.0
    %1578 = vmatprep.subr.mxu0 0.0
    %1579 = vmatpush1.msra.mxu0 0.0
    %1580 = vmatprep.subr.mxu0 0.0
    %1581 = vmatpush1.msra.mxu0 0.0
    %1582 = vmatprep.subr.mxu0 0.0
    %1583 = vmatpush1.msra.mxu0 0.0
    %1584 = vmatprep.subr.mxu0 0.0
    %1585 = vmatpush1.msra.mxu0 0.0
    %1586 = vmatprep.subr.mxu0 0.0
    %1587 = vmatpush1.msra.mxu0 0.0
    %1588 = vmatprep.subr.mxu0 0.0
    %1589 = vmatpush1.msra.mxu0 0.0
    %1590 = vmatprep.subr.mxu0 0.0
    %1591 = vmatpush1.msra.mxu0 0.0
    %1592 = vmatprep.subr.mxu0 0.0
    %1593 = vmatpush1.msra.mxu0 0.0
    %1594 = vmatprep.subr.mxu0 0.0
    %1595 = vmatpush1.msra.mxu0 0.0
    %1596 = vmatprep.subr.mxu0 0.0
    %1597 = vmatpush1.msra.mxu0 0.0
    %1598 = vmatprep.subr.mxu0 0.0
    %1599 = vmatpush1.msra.mxu0 0.0
    %1600 = vmatprep.subr.mxu0 0.0
    %1601 = vmatpush1.msra.mxu0 0.0
    %1602 = vmatprep.subr.mxu0 0.0
    %1603 = vmatpush1.msra.mxu0 0.0
    %1604 = vmatprep.subr.mxu0 0.0
    %1605 = vmatpush1.msra.mxu0 0.0
    %1606 = vmatprep.mubr.f32.mxu0 0.0
    %1607 = vmatmul.mubr.f32.gmra.mrb[0].mxu0 %v774
    %v1608 = vpop.f32.mrb[0].mxu0
    %v1609 = vadd.f32 0.0, %v1608
    %v1610 = vpop.f32.mrb[0].mxu0
    %1611 = vmatprep.mubr.f32.mxu0 0.0
    %1612 = vmatmul.mubr.f32.gmra.mrb[0].mxu0 %v777
    %v1613 = vpop.f32.mrb[0].mxu0
    %v1614 = vadd.f32 0.0, %v1613
    %v1615 = vpop.f32.mrb[0].mxu0
    %1616 = vmatprep.mubr.f32.mxu0 0.0
    %1617 = vmatmul.mubr.f32.gmra.mrb[0].mxu0 %v780
    %v1618 = vpop.f32.mrb[0].mxu0
    %v1619 = vadd.f32 0.0, %v1618
    %v1620 = vpop.f32.mrb[0].mxu0
    %1621 = vmatprep.mubr.f32.mxu0 0.0
    %1622 = vmatmul.mubr.f32.gmra.mrb[0].mxu0 %v783
    %v1623 = vpop.f32.mrb[0].mxu0
    %v1624 = vadd.f32 0.0, %v1623
    %v1625 = vpop.f32.mrb[0].mxu0
    %1626 = vdwg.mxu0
    %v1627 = vadd.f32 %v1533, %v1609
    %v1628 = vadd.f32 %v1534, %v1614
    %v1629 = vadd.f32 %v1535, %v1619
    %v1630 = vadd.f32 %v1536, %v1624
    %vm1635 = vcmask 1046528
    %v1636 = vrot.slane %v1627, 1
    %v1637 = vrot.slane %v1628, 1
    %v1638 = vsel %vm1635, %v1636, %v1637
    %v1639 = vrot.slane %v1629, 1
    %v1640 = vrot.slane %v1630, 1
    %v1641 = vsel %vm1635, %v1639, %v1640
    %v1646 = vsel %vm1635, %v1637, 0.0
    %v1647 = vsel %vm1635, %v1640, 0.0
    %v1648 = vadd.f32 %v1259, %v1638
    %v1649 = vadd.f32 %v1260, %v1646
    %v1650 = vadd.f32 %v1261, %v1641
    %v1651 = vadd.f32 %v1262, %v1647
    %v1652 = vld [vmem:[%s9] sm:$0x1]
    %v1654 = vlaneseq
    %v1655 = vshrl.u32 %v1654, 7
    %v1656 = vsub.s32 0, %v1655
    %v1657 = vrot.slane %v1652, %v1656
    %v1659 = vadd.f32 %v1648, %v1657
    %v1660 = vadd.f32 %v1649, %v1657
    %v1661 = vadd.f32 %v1650, %v1657
    %v1662 = vadd.f32 %v1651, %v1657
    %v1663 = vmul.f32 %v1659, 0.5
    %v1664 = vmul.f32 %v1660, 0.5
    %v1665 = vmul.f32 %v1661, 0.5
    %v1666 = vmul.f32 %v1662, 0.5
    %v1667 = vmul.f32 %v1659, 0.70710677
    %v1668 = vmul.f32 %v1660, 0.70710677
    %v1669 = vmul.f32 %v1661, 0.70710677
    %v1670 = vmul.f32 %v1662, 0.70710677
    %v1671 = vand.u32 2147483647, %v1667
    %v1672 = vand.u32 2147483647, %v1668
    %v1673 = vand.u32 2147483647, %v1669
    %v1674 = vand.u32 2147483647, %v1670
    %v1675 = vmul.f32 %v1671, 0.3275911
    %v1676 = vmul.f32 %v1672, 0.3275911
    %v1677 = vmul.f32 %v1673, 0.3275911
    %v1678 = vmul.f32 %v1674, 0.3275911
    %v1679 = vadd.f32 %v1675, 1.0
    %v1680 = vadd.f32 %v1676, 1.0
    %v1681 = vadd.f32 %v1677, 1.0
    %v1682 = vadd.f32 %v1678, 1.0
    %v1683 = vrcp.pop %v1679
    %v1684 = vmul.f32 1.0, %v1683
    %v1685 = vrcp.pop %v1680
    %v1686 = vmul.f32 1.0, %v1685
    %v1687 = vrcp.pop %v1681
    %v1688 = vmul.f32 1.0, %v1687
    %v1689 = vrcp.pop %v1682
    %v1690 = vmul.f32 1.0, %v1689
    %v1691 = vmul.f32 %v1684, 1.0614054
    %v1692 = vmul.f32 %v1686, 1.0614054
    %v1693 = vmul.f32 %v1688, 1.0614054
    %v1694 = vmul.f32 %v1690, 1.0614054
    %v1695 = vadd.f32 %v1691, -1.4531521
    %v1696 = vadd.f32 %v1692, -1.4531521
    %v1697 = vadd.f32 %v1693, -1.4531521
    %v1698 = vadd.f32 %v1694, -1.4531521
    %v1699 = vmul.f32 %v1695, %v1684
    %v1700 = vmul.f32 %v1696, %v1686
    %v1701 = vmul.f32 %v1697, %v1688
    %v1702 = vmul.f32 %v1698, %v1690
    %v1703 = vadd.f32 %v1699, 1.4214138
    %v1704 = vadd.f32 %v1700, 1.4214138
    %v1705 = vadd.f32 %v1701, 1.4214138
    %v1706 = vadd.f32 %v1702, 1.4214138
    %v1707 = vmul.f32 %v1703, %v1684
    %v1708 = vmul.f32 %v1704, %v1686
    %v1709 = vmul.f32 %v1705, %v1688
    %v1710 = vmul.f32 %v1706, %v1690
    %v1711 = vadd.f32 %v1707, -0.28449672
    %v1712 = vadd.f32 %v1708, -0.28449672
    %v1713 = vadd.f32 %v1709, -0.28449672
    %v1714 = vadd.f32 %v1710, -0.28449672
    %v1715 = vmul.f32 %v1711, %v1684
    %v1716 = vmul.f32 %v1712, %v1686
    %v1717 = vmul.f32 %v1713, %v1688
    %v1718 = vmul.f32 %v1714, %v1690
    %v1719 = vadd.f32 %v1715, 0.2548296
    %v1720 = vadd.f32 %v1716, 0.2548296
    %v1721 = vadd.f32 %v1717, 0.2548296
    %v1722 = vadd.f32 %v1718, 0.2548296
    %v1723 = vmul.f32 %v1719, %v1684
    %v1724 = vmul.f32 %v1720, %v1686
    %v1725 = vmul.f32 %v1721, %v1688
    %v1726 = vmul.f32 %v1722, %v1690
    %v1727 = vmul.f32 %v1671, %v1671
    %v1728 = vmul.f32 %v1672, %v1672
    %v1729 = vmul.f32 %v1673, %v1673
    %v1730 = vmul.f32 %v1674, %v1674
    %v1731 = vsub.f32 0.0, %v1727
    %v1732 = vsub.f32 0.0, %v1728
    %v1733 = vsub.f32 0.0, %v1729
    %v1734 = vsub.f32 0.0, %v1730
    %v1735 = vmul.f32 %v1731, 1.442695
    %v1736 = vpow.pop %v1735
    %v1737 = vmul.f32 %v1732, 1.442695
    %v1738 = vpow.pop %v1737
    %v1739 = vmul.f32 %v1733, 1.442695
    %v1740 = vpow.pop %v1739
    %v1741 = vmul.f32 %v1734, 1.442695
    %v1742 = vpow.pop %v1741
    %v1743 = vmul.f32 %v1723, %v1736
    %v1744 = vmul.f32 %v1724, %v1738
    %v1745 = vmul.f32 %v1725, %v1740
    %v1746 = vmul.f32 %v1726, %v1742
    %v1747 = vsub.f32 1.0, %v1743
    %v1748 = vsub.f32 1.0, %v1744
    %v1749 = vsub.f32 1.0, %v1745
    %v1750 = vsub.f32 1.0, %v1746
    %vm1751 = vcmp.ge.f32.partialorder %v1667, 0.0
    %vm1752 = vcmp.ge.f32.partialorder %v1668, 0.0
    %vm1753 = vcmp.ge.f32.partialorder %v1669, 0.0
    %vm1754 = vcmp.ge.f32.partialorder %v1670, 0.0
    %v1755 = vsub.f32 0.0, %v1747
    %v1756 = vsub.f32 0.0, %v1748
    %v1757 = vsub.f32 0.0, %v1749
    %v1758 = vsub.f32 0.0, %v1750
    %v1759 = vsel %vm1751, %v1747, %v1755
    %v1760 = vsel %vm1752, %v1748, %v1756
    %v1761 = vsel %vm1753, %v1749, %v1757
    %v1762 = vsel %vm1754, %v1750, %v1758
    %v1763 = vadd.f32 %v1759, 1.0
    %v1764 = vadd.f32 %v1760, 1.0
    %v1765 = vadd.f32 %v1761, 1.0
    %v1766 = vadd.f32 %v1762, 1.0
    %v1767 = vmul.f32 %v1663, %v1763
    %v1768 = vmul.f32 %v1664, %v1764
    %v1769 = vmul.f32 %v1665, %v1765
    %v1770 = vmul.f32 %v1666, %v1766
    %v1771 = vld [vmem:[%s10] sm:$0xff]
    %v1772 = vld [vmem:[%s10 + $0x8] sm:$0xff]
    %v1773 = vld [vmem:[%s10 + $0x10] sm:$0xff]
    %v1774 = vld [vmem:[%s10 + $0x18] sm:$0xff]
    %v1775 = vld [vmem:[%s10 + $0x20] sm:$0xff]
    %v1776 = vld [vmem:[%s10 + $0x28] sm:$0xff]
    %v1777 = vld [vmem:[%s10 + $0x30] sm:$0xff]
    %v1778 = vld [vmem:[%s10 + $0x38] sm:$0xff]
    %v1779 = vld [vmem:[%s10 + $0x40] sm:$0xff]
    %v1780 = vld [vmem:[%s10 + $0x48] sm:$0xff]
    %v1781 = vld [vmem:[%s10 + $0x50] sm:$0xff]
    %v1782 = vld [vmem:[%s10 + $0x58] sm:$0xff]
    %v1783 = vld [vmem:[%s10 + $0x60] sm:$0xff]
    %v1784 = vld [vmem:[%s10 + $0x68] sm:$0xff]
    %v1785 = vld [vmem:[%s10 + $0x70] sm:$0xff]
    %v1786 = vld [vmem:[%s10 + $0x78] sm:$0xff]
    %1787 = vmatprep.subr.mxu0 0.0
    %1788 = vmatpush1.msra.mxu0 %v1771
    %1789 = vmatprep.subr.mxu0 0.0
    %1790 = vmatpush1.msra.mxu0 %v1772
    %1791 = vmatprep.subr.mxu0 0.0
    %1792 = vmatpush1.msra.mxu0 %v1773
    %1793 = vmatprep.subr.mxu0 0.0
    %1794 = vmatpush1.msra.mxu0 %v1774
    %1795 = vmatprep.subr.mxu0 0.0
    %1796 = vmatpush1.msra.mxu0 %v1775
    %1797 = vmatprep.subr.mxu0 0.0
    %1798 = vmatpush1.msra.mxu0 %v1776
    %1799 = vmatprep.subr.mxu0 0.0
    %1800 = vmatpush1.msra.mxu0 %v1777
    %1801 = vmatprep.subr.mxu0 0.0
    %1802 = vmatpush1.msra.mxu0 %v1778
    %1803 = vmatprep.subr.mxu0 0.0
    %1804 = vmatpush1.msra.mxu0 %v1779
    %1805 = vmatprep.subr.mxu0 0.0
    %1806 = vmatpush1.msra.mxu0 %v1780
    %1807 = vmatprep.subr.mxu0 0.0
    %1808 = vmatpush1.msra.mxu0 %v1781
    %1809 = vmatprep.subr.mxu0 0.0
    %1810 = vmatpush1.msra.mxu0 %v1782
    %1811 = vmatprep.subr.mxu0 0.0
    %1812 = vmatpush1.msra.mxu0 %v1783
    %1813 = vmatprep.subr.mxu0 0.0
    %1814 = vmatpush1.msra.mxu0 %v1784
    %1815 = vmatprep.subr.mxu0 0.0
    %1816 = vmatpush1.msra.mxu0 %v1785
    %1817 = vmatprep.subr.mxu0 0.0
    %1818 = vmatpush1.msra.mxu0 %v1786
    %1819 = vmatprep.subr.mxu0 0.0
    %1820 = vmatpush1.msra.mxu0 0.0
    %1821 = vmatprep.subr.mxu0 0.0
    %1822 = vmatpush1.msra.mxu0 0.0
    %1823 = vmatprep.subr.mxu0 0.0
    %1824 = vmatpush1.msra.mxu0 0.0
    %1825 = vmatprep.subr.mxu0 0.0
    %1826 = vmatpush1.msra.mxu0 0.0
    %1827 = vmatprep.subr.mxu0 0.0
    %1828 = vmatpush1.msra.mxu0 0.0
    %1829 = vmatprep.subr.mxu0 0.0
    %1830 = vmatpush1.msra.mxu0 0.0
    %1831 = vmatprep.subr.mxu0 0.0
    %1832 = vmatpush1.msra.mxu0 0.0
    %1833 = vmatprep.subr.mxu0 0.0
    %1834 = vmatpush1.msra.mxu0 0.0
    %1835 = vmatprep.subr.mxu0 0.0
    %1836 = vmatpush1.msra.mxu0 0.0
    %1837 = vmatprep.subr.mxu0 0.0
    %1838 = vmatpush1.msra.mxu0 0.0
    %1839 = vmatprep.subr.mxu0 0.0
    %1840 = vmatpush1.msra.mxu0 0.0
    %1841 = vmatprep.subr.mxu0 0.0
    %1842 = vmatpush1.msra.mxu0 0.0
    %1843 = vmatprep.subr.mxu0 0.0
    %1844 = vmatpush1.msra.mxu0 0.0
    %1845 = vmatprep.subr.mxu0 0.0
    %1846 = vmatpush1.msra.mxu0 0.0
    %1847 = vmatprep.subr.mxu0 0.0
    %1848 = vmatpush1.msra.mxu0 0.0
    %1849 = vmatprep.subr.mxu0 0.0
    %1850 = vmatpush1.msra.mxu0 0.0
    %1851 = vmatprep.mubr.f32.mxu0 0.0
    %1852 = vmatmul.mubr.f32.gmra.mrb[0].mxu0 %v1767
    %v1853 = vpop.f32.mrb[0].mxu0
    %v1854 = vadd.f32 0.0, %v1853
    %v1855 = vpop.f32.mrb[0].mxu0
    %1856 = vmatprep.mubr.f32.mxu0 0.0
    %1857 = vmatmul.mubr.f32.gmra.mrb[0].mxu0 %v1768
    %v1858 = vpop.f32.mrb[0].mxu0
    %v1859 = vadd.f32 0.0, %v1858
    %v1860 = vpop.f32.mrb[0].mxu0
    %1861 = vmatprep.mubr.f32.mxu0 0.0
    %1862 = vmatmul.mubr.f32.gmra.mrb[0].mxu0 %v1769
    %v1863 = vpop.f32.mrb[0].mxu0
    %v1864 = vadd.f32 0.0, %v1863
    %v1865 = vpop.f32.mrb[0].mxu0
    %1866 = vmatprep.mubr.f32.mxu0 0.0
    %1867 = vmatmul.mubr.f32.gmra.mrb[0].mxu0 %v1770
    %v1868 = vpop.f32.mrb[0].mxu0
    %v1869 = vadd.f32 0.0, %v1868
    %v1870 = vpop.f32.mrb[0].mxu0
    %1871 = vdwg.mxu0
    %v1876 = vrot.slane %v1854, 7
    %v1877 = vrot.slane %v1859, 7
    %v1878 = vsel %vm878, %v1876, %v1877
    %v1879 = vrot.slane %v1864, 7
    %v1880 = vrot.slane %v1869, 7
    %v1881 = vsel %vm878, %v1879, %v1880
    %v1886 = vsel %vm878, 0.0, %v1876
    %v1887 = vsel %vm878, 0.0, %v1879
    %s1888 = scalar_lea.vmem %s10, 128
    %v1889 = vld [vmem:[%s1888] sm:$0xff]
    %v1890 = vld [vmem:[%s1888 + $0x8] sm:$0xff]
    %v1891 = vld [vmem:[%s1888 + $0x10] sm:$0xff]
    %v1892 = vld [vmem:[%s1888 + $0x18] sm:$0xff]
    %v1893 = vld [vmem:[%s1888 + $0x20] sm:$0xff]
    %v1894 = vld [vmem:[%s1888 + $0x28] sm:$0xff]
    %v1895 = vld [vmem:[%s1888 + $0x30] sm:$0xff]
    %v1896 = vld [vmem:[%s1888 + $0x38] sm:$0xff]
    %v1897 = vld [vmem:[%s1888 + $0x40] sm:$0xff]
    %v1898 = vld [vmem:[%s1888 + $0x48] sm:$0xff]
    %v1899 = vld [vmem:[%s1888 + $0x50] sm:$0xff]
    %v1900 = vld [vmem:[%s1888 + $0x58] sm:$0xff]
    %v1901 = vld [vmem:[%s1888 + $0x60] sm:$0xff]
    %v1902 = vld [vmem:[%s1888 + $0x68] sm:$0xff]
    %v1903 = vld [vmem:[%s1888 + $0x70] sm:$0xff]
    %v1904 = vld [vmem:[%s1888 + $0x78] sm:$0xff]
    %1905 = vmatprep.subr.mxu0 0.0
    %1906 = vmatpush1.msra.mxu0 %v1889
    %1907 = vmatprep.subr.mxu0 0.0
    %1908 = vmatpush1.msra.mxu0 %v1890
    %1909 = vmatprep.subr.mxu0 0.0
    %1910 = vmatpush1.msra.mxu0 %v1891
    %1911 = vmatprep.subr.mxu0 0.0
    %1912 = vmatpush1.msra.mxu0 %v1892
    %1913 = vmatprep.subr.mxu0 0.0
    %1914 = vmatpush1.msra.mxu0 %v1893
    %1915 = vmatprep.subr.mxu0 0.0
    %1916 = vmatpush1.msra.mxu0 %v1894
    %1917 = vmatprep.subr.mxu0 0.0
    %1918 = vmatpush1.msra.mxu0 %v1895
    %1919 = vmatprep.subr.mxu0 0.0
    %1920 = vmatpush1.msra.mxu0 %v1896
    %1921 = vmatprep.subr.mxu0 0.0
    %1922 = vmatpush1.msra.mxu0 %v1897
    %1923 = vmatprep.subr.mxu0 0.0
    %1924 = vmatpush1.msra.mxu0 %v1898
    %1925 = vmatprep.subr.mxu0 0.0
    %1926 = vmatpush1.msra.mxu0 %v1899
    %1927 = vmatprep.subr.mxu0 0.0
    %1928 = vmatpush1.msra.mxu0 %v1900
    %1929 = vmatprep.subr.mxu0 0.0
    %1930 = vmatpush1.msra.mxu0 %v1901
    %1931 = vmatprep.subr.mxu0 0.0
    %1932 = vmatpush1.msra.mxu0 %v1902
    %1933 = vmatprep.subr.mxu0 0.0
    %1934 = vmatpush1.msra.mxu0 %v1903
    %1935 = vmatprep.subr.mxu0 0.0
    %1936 = vmatpush1.msra.mxu0 %v1904
    %1937 = vmatprep.subr.mxu0 0.0
    %1938 = vmatpush1.msra.mxu0 0.0
    %1939 = vmatprep.subr.mxu0 0.0
    %1940 = vmatpush1.msra.mxu0 0.0
    %1941 = vmatprep.subr.mxu0 0.0
    %1942 = vmatpush1.msra.mxu0 0.0
    %1943 = vmatprep.subr.mxu0 0.0
    %1944 = vmatpush1.msra.mxu0 0.0
    %1945 = vmatprep.subr.mxu0 0.0
    %1946 = vmatpush1.msra.mxu0 0.0
    %1947 = vmatprep.subr.mxu0 0.0
    %1948 = vmatpush1.msra.mxu0 0.0
    %1949 = vmatprep.subr.mxu0 0.0
    %1950 = vmatpush1.msra.mxu0 0.0
    %1951 = vmatprep.subr.mxu0 0.0
    %1952 = vmatpush1.msra.mxu0 0.0
    %1953 = vmatprep.subr.mxu0 0.0
    %1954 = vmatpush1.msra.mxu0 0.0
    %1955 = vmatprep.subr.mxu0 0.0
    %1956 = vmatpush1.msra.mxu0 0.0
    %1957 = vmatprep.subr.mxu0 0.0
    %1958 = vmatpush1.msra.mxu0 0.0
    %1959 = vmatprep.subr.mxu0 0.0
    %1960 = vmatpush1.msra.mxu0 0.0
    %1961 = vmatprep.subr.mxu0 0.0
    %1962 = vmatpush1.msra.mxu0 0.0
    %1963 = vmatprep.subr.mxu0 0.0
    %1964 = vmatpush1.msra.mxu0 0.0
    %1965 = vmatprep.subr.mxu0 0.0
    %1966 = vmatpush1.msra.mxu0 0.0
    %1967 = vmatprep.subr.mxu0 0.0
    %1968 = vmatpush1.msra.mxu0 0.0
    %1969 = vmatprep.mubr.f32.mxu0 0.0
    %1970 = vmatmul.mubr.f32.gmra.mrb[0].mxu0 %v1767
    %v1971 = vpop.f32.mrb[0].mxu0
    %v1972 = vadd.f32 0.0, %v1971
    %v1973 = vpop.f32.mrb[0].mxu0
    %1974 = vmatprep.mubr.f32.mxu0 0.0
    %1975 = vmatmul.mubr.f32.gmra.mrb[0].mxu0 %v1768
    %v1976 = vpop.f32.mrb[0].mxu0
    %v1977 = vadd.f32 0.0, %v1976
    %v1978 = vpop.f32.mrb[0].mxu0
    %1979 = vmatprep.mubr.f32.mxu0 0.0
    %1980 = vmatmul.mubr.f32.gmra.mrb[0].mxu0 %v1769
    %v1981 = vpop.f32.mrb[0].mxu0
    %v1982 = vadd.f32 0.0, %v1981
    %v1983 = vpop.f32.mrb[0].mxu0
    %1984 = vmatprep.mubr.f32.mxu0 0.0
    %1985 = vmatmul.mubr.f32.gmra.mrb[0].mxu0 %v1770
    %v1986 = vpop.f32.mrb[0].mxu0
    %v1987 = vadd.f32 0.0, %v1986
    %v1988 = vpop.f32.mrb[0].mxu0
    %1989 = vdwg.mxu0
    %v1990 = vadd.f32 %v1886, %v1972
    %v1991 = vadd.f32 %v1878, %v1977
    %v1992 = vadd.f32 %v1887, %v1982
    %v1993 = vadd.f32 %v1881, %v1987
    %s1994 = scalar_lea.vmem %s10, 256
    %v1995 = vld [vmem:[%s1994] sm:$0xff]
    %v1996 = vld [vmem:[%s1994 + $0x8] sm:$0xff]
    %v1997 = vld [vmem:[%s1994 + $0x10] sm:$0xff]
    %v1998 = vld [vmem:[%s1994 + $0x18] sm:$0xff]
    %v1999 = vld [vmem:[%s1994 + $0x20] sm:$0xff]
    %v2000 = vld [vmem:[%s1994 + $0x28] sm:$0xff]
    %v2001 = vld [vmem:[%s1994 + $0x30] sm:$0xff]
    %v2002 = vld [vmem:[%s1994 + $0x38] sm:$0xff]
    %v2003 = vld [vmem:[%s1994 + $0x40] sm:$0xff]
    %v2004 = vld [vmem:[%s1994 + $0x48] sm:$0xff]
    %v2005 = vld [vmem:[%s1994 + $0x50] sm:$0xff]
    %v2006 = vld [vmem:[%s1994 + $0x58] sm:$0xff]
    %v2007 = vld [vmem:[%s1994 + $0x60] sm:$0xff]
    %v2008 = vld [vmem:[%s1994 + $0x68] sm:$0xff]
    %v2009 = vld [vmem:[%s1994 + $0x70] sm:$0xff]
    %v2010 = vld [vmem:[%s1994 + $0x78] sm:$0xff]
    %2011 = vmatprep.subr.mxu0 0.0
    %2012 = vmatpush1.msra.mxu0 %v1995
    %2013 = vmatprep.subr.mxu0 0.0
    %2014 = vmatpush1.msra.mxu0 %v1996
    %2015 = vmatprep.subr.mxu0 0.0
    %2016 = vmatpush1.msra.mxu0 %v1997
    %2017 = vmatprep.subr.mxu0 0.0
    %2018 = vmatpush1.msra.mxu0 %v1998
    %2019 = vmatprep.subr.mxu0 0.0
    %2020 = vmatpush1.msra.mxu0 %v1999
    %2021 = vmatprep.subr.mxu0 0.0
    %2022 = vmatpush1.msra.mxu0 %v2000
    %2023 = vmatprep.subr.mxu0 0.0
    %2024 = vmatpush1.msra.mxu0 %v2001
    %2025 = vmatprep.subr.mxu0 0.0
    %2026 = vmatpush1.msra.mxu0 %v2002
    %2027 = vmatprep.subr.mxu0 0.0
    %2028 = vmatpush1.msra.mxu0 %v2003
    %2029 = vmatprep.subr.mxu0 0.0
    %2030 = vmatpush1.msra.mxu0 %v2004
    %2031 = vmatprep.subr.mxu0 0.0
    %2032 = vmatpush1.msra.mxu0 %v2005
    %2033 = vmatprep.subr.mxu0 0.0
    %2034 = vmatpush1.msra.mxu0 %v2006
    %2035 = vmatprep.subr.mxu0 0.0
    %2036 = vmatpush1.msra.mxu0 %v2007
    %2037 = vmatprep.subr.mxu0 0.0
    %2038 = vmatpush1.msra.mxu0 %v2008
    %2039 = vmatprep.subr.mxu0 0.0
    %2040 = vmatpush1.msra.mxu0 %v2009
    %2041 = vmatprep.subr.mxu0 0.0
    %2042 = vmatpush1.msra.mxu0 %v2010
    %2043 = vmatprep.subr.mxu0 0.0
    %2044 = vmatpush1.msra.mxu0 0.0
    %2045 = vmatprep.subr.mxu0 0.0
    %2046 = vmatpush1.msra.mxu0 0.0
    %2047 = vmatprep.subr.mxu0 0.0
    %2048 = vmatpush1.msra.mxu0 0.0
    %2049 = vmatprep.subr.mxu0 0.0
    %2050 = vmatpush1.msra.mxu0 0.0
    %2051 = vmatprep.subr.mxu0 0.0
    %2052 = vmatpush1.msra.mxu0 0.0
    %2053 = vmatprep.subr.mxu0 0.0
    %2054 = vmatpush1.msra.mxu0 0.0
    %2055 = vmatprep.subr.mxu0 0.0
    %2056 = vmatpush1.msra.mxu0 0.0
    %2057 = vmatprep.subr.mxu0 0.0
    %2058 = vmatpush1.msra.mxu0 0.0
    %2059 = vmatprep.subr.mxu0 0.0
    %2060 = vmatpush1.msra.mxu0 0.0
    %2061 = vmatprep.subr.mxu0 0.0
    %2062 = vmatpush1.msra.mxu0 0.0
    %2063 = vmatprep.subr.mxu0 0.0
    %2064 = vmatpush1.msra.mxu0 0.0
    %2065 = vmatprep.subr.mxu0 0.0
    %2066 = vmatpush1.msra.mxu0 0.0
    %2067 = vmatprep.subr.mxu0 0.0
    %2068 = vmatpush1.msra.mxu0 0.0
    %2069 = vmatprep.subr.mxu0 0.0
    %2070 = vmatpush1.msra.mxu0 0.0
    %2071 = vmatprep.subr.mxu0 0.0
    %2072 = vmatpush1.msra.mxu0 0.0
    %2073 = vmatprep.subr.mxu0 0.0
    %2074 = vmatpush1.msra.mxu0 0.0
    %2075 = vmatprep.mubr.f32.mxu0 0.0
    %2076 = vmatmul.mubr.f32.gmra.mrb[0].mxu0 %v1767
    %v2077 = vpop.f32.mrb[0].mxu0
    %v2078 = vadd.f32 0.0, %v2077
    %v2079 = vpop.f32.mrb[0].mxu0
    %2080 = vmatprep.mubr.f32.mxu0 0.0
    %2081 = vmatmul.mubr.f32.gmra.mrb[0].mxu0 %v1768
    %v2082 = vpop.f32.mrb[0].mxu0
    %v2083 = vadd.f32 0.0, %v2082
    %v2084 = vpop.f32.mrb[0].mxu0
    %2085 = vmatprep.mubr.f32.mxu0 0.0
    %2086 = vmatmul.mubr.f32.gmra.mrb[0].mxu0 %v1769
    %v2087 = vpop.f32.mrb[0].mxu0
    %v2088 = vadd.f32 0.0, %v2087
    %v2089 = vpop.f32.mrb[0].mxu0
    %2090 = vmatprep.mubr.f32.mxu0 0.0
    %2091 = vmatmul.mubr.f32.gmra.mrb[0].mxu0 %v1770
    %v2092 = vpop.f32.mrb[0].mxu0
    %v2093 = vadd.f32 0.0, %v2092
    %v2094 = vpop.f32.mrb[0].mxu0
    %2095 = vdwg.mxu0
    %v2100 = vrot.slane %v2078, 1
    %v2101 = vrot.slane %v2083, 1
    %v2102 = vsel %vm1635, %v2100, %v2101
    %v2103 = vrot.slane %v2088, 1
    %v2104 = vrot.slane %v2093, 1
    %v2105 = vsel %vm1635, %v2103, %v2104
    %v2110 = vsel %vm1635, %v2101, 0.0
    %v2111 = vsel %vm1635, %v2104, 0.0
    %v2112 = vadd.f32 %v1990, %v2102
    %v2113 = vadd.f32 %v1991, %v2110
    %v2114 = vadd.f32 %v1992, %v2105
    %v2115 = vadd.f32 %v1993, %v2111
    %v2116 = vld [vmem:[%s11] sm:$0x1]
    %v2118 = vlaneseq
    %v2119 = vshrl.u32 %v2118, 7
    %v2120 = vsub.s32 0, %v2119
    %v2121 = vrot.slane %v2116, %v2120
    %v2123 = vadd.f32 %v2112, %v2121
    %v2124 = vadd.f32 %v2113, %v2121
    %v2125 = vadd.f32 %v2114, %v2121
    %v2126 = vadd.f32 %v2115, %v2121
    %2127 = vst.msk [vmem:[#allocation2] sm:$0xff] %vm467, %v2123
    %2128 = vst.msk [vmem:[#allocation2 + $0x8] sm:$0xff] %vm467, %v2124
    %2129 = vst.msk [vmem:[#allocation2 + $0x10] sm:$0xff] %vm467, %v2125
    %2130 = vst.msk [vmem:[#allocation2 + $0x18] sm:$0xff] %vm467, %v2126
    %2135 = vrot.lane.b32.xlu0 %v2123, 96
    %v2136 = vpop.permute.xlu0 %2135
    %2137 = vrot.lane.b32.xlu0 %v2124, 96
    %v2138 = vpop.permute.xlu0 %2137
    %2139 = vrot.lane.b32.xlu0 %v2125, 96
    %v2140 = vpop.permute.xlu0 %2139
    %2141 = vrot.lane.b32.xlu0 %v2126, 96
    %v2142 = vpop.permute.xlu0 %2141
    %2147 = vst.msk [vmem:[#allocation4] sm:$0xff] %vm467, %v2136
    %2148 = vst.msk [vmem:[#allocation4 + $0x8] sm:$0xff] %vm467, %v2138
    %2149 = vst.msk [vmem:[#allocation4 + $0x10] sm:$0xff] %vm467, %v2140
    %2150 = vst.msk [vmem:[#allocation4 + $0x18] sm:$0xff] %vm467, %v2142
    // Predicated region
    $region50: #{local_aware_diffusion_pallas.1} parent=1 // pred_check
      _
    $region51: #{local_aware_diffusion_pallas.1} parent=1 // pred_check_branch
      %2152 = sbr.rel (0) target = $region53
    $region52: #{local_aware_diffusion_pallas.1} parent=1 // pred_region
      %s2154 = ssub.s32 512, 512
      %2155 = vsyncadd [#allocation3], %s2154
      %s2156 = sshll.u32 [#allocation2], 4
      %s2157 = int_to_ptr.vmem [resolvable:$true] %s2156
      %2162 = dma.vmem_to_hbm [thread:$0]  %s2157, 512, %s12, [#allocation3], 128, 128, 8
    $region53: #{local_aware_diffusion_pallas.1} parent=1 // pred_fallthru
      _
    // Predicated region
    $region54: #{local_aware_diffusion_pallas.1} parent=1 // pred_check
      _
    $region55: #{local_aware_diffusion_pallas.1} parent=1 // pred_check_branch
      %2164 = sbr.rel (0) target = $region57
    $region56: #{local_aware_diffusion_pallas.1} parent=1 // pred_region
      %s2166 = ssub.s32 512, 512
      %2167 = vsyncadd [#allocation5], %s2166
      %s2168 = sshll.u32 [#allocation4], 4
      %s2169 = int_to_ptr.vmem [resolvable:$true] %s2168
      %2174 = dma.vmem_to_hbm [thread:$0]  %s2169, 512, %s13, [#allocation5], 128, 128, 8
    $region57: #{local_aware_diffusion_pallas.1} parent=1 // pred_fallthru
      _
    // Predicated region
    $region58: #{local_aware_diffusion_pallas.1} parent=1 // pred_check
      _
    $region59: #{local_aware_diffusion_pallas.1} parent=1 // pred_check_branch
      %2176 = sbr.rel (0) target = $region61
    $region60: #{local_aware_diffusion_pallas.1} parent=1 // pred_region
      %2177 = dma.done [#allocation3], 512
    $region61: #{local_aware_diffusion_pallas.1} parent=1 // pred_fallthru
      _
    // Predicated region
    $region62: #{local_aware_diffusion_pallas.1} parent=1 // pred_check
      _
    $region63: #{local_aware_diffusion_pallas.1} parent=1 // pred_check_branch
      %2179 = sbr.rel (0) target = $region65
    $region64: #{local_aware_diffusion_pallas.1} parent=1 // pred_region
      %2180 = dma.done [#allocation5], 512
    $region65: #{local_aware_diffusion_pallas.1} parent=1 // pred_fallthru
      _
    %2181 = vsyncpa [#allocation3], 1
    %2182 = vsyncpa [#allocation5], 1

</llo_original>
